<compile_context>
chip_gen: v5e
topology: v5e:2x2
jax: 0.10.0
libtpu: 0.0.40
codegen_flags: <defaults>
</compile_context>

<pallas_src>
import functools

import jax
import jax.numpy as jnp
from jax.experimental import pallas as pl
from jax.experimental.pallas import tpu as pltpu


# ----------------------------------------------------------------------------
# Fused Pallas kernel: entire HuPRNet forward for one batch element
# ----------------------------------------------------------------------------
def _hupr_fused_kernel(x_ref,
                       wm_ref, bm_ref,
                       w1_ref, b1_ref, pa_ref,
                       w2_ref, b2_ref, pb_ref,
                       w3_ref, b3_ref,
                       wh1_ref, wh2_ref, wh3_ref, bh_ref,
                       ub_ref, uc_ref,
                       wc_ref, bc_ref,
                       heat_ref, gcn_ref, *, num_keypoints):
    """Channels-first fused forward.  x_ref: (Cin, P) bf16, P = R*A pixels.

    Every operation is a matmul / VPU pointwise op; 2x2 avg-pool and nearest
    upsample are pixel-mixing matmuls, so there are no in-kernel reshapes.
    """
    f32 = jnp.float32
    bf = jnp.bfloat16

    def dot(a, b):
        return jnp.dot(a, b, preferred_element_type=f32)

    # MNet (both views + all group frames block-diag, elevation mean folded
    # into the weights) + ReLU                      -> (2*G*nf, P)
    maps = jnp.maximum(dot(wm_ref[...], x_ref[...]) + bm_ref[...], 0.0)

    # Encoder3D stage 1 (group frames folded into channels) + ReLU
    #                                               -> (2*C1, P)
    l1 = jnp.maximum(dot(w1_ref[...], maps.astype(bf)) + b1_ref[...], 0.0)
    l1b = l1.astype(bf)

    # 2x2 average pool as a pixel-mixing matmul, then stage 2 + ReLU
    #                                               -> (2*C2, P/4)
    l1p = dot(l1b, pa_ref[...]).astype(bf)
    l2 = jnp.maximum(dot(w2_ref[...], l1p) + b2_ref[...], 0.0)
    l2b = l2.astype(bf)

    # second pool + stage 3 + ReLU                  -> (2*C3, P/16)
    l2p = dot(l2b, pb_ref[...]).astype(bf)
    feat = jnp.maximum(dot(w3_ref[...], l2p) + b3_ref[...], 0.0)
    featb = feat.astype(bf)

    # Decoder: multi-scale hidden projection.  The fuse/concat never exists —
    # wh is split per scale, and the 2x/4x nearest upsamples are folded into
    # pixel-mixing matmuls applied to the (small) per-scale hidden slabs.
    hid = dot(wh1_ref[...], l1b)                                   # (Dh, P)
    hid = hid + dot(dot(wh2_ref[...], l2b).astype(bf), ub_ref[...])
    hid = hid + dot(dot(wh3_ref[...], featb).astype(bf), uc_ref[...])
    hid = hid + bh_ref[...]
    hid = jnp.where(hid >= 0.0, hid, 0.25 * hid)                   # nn.PReLU default

    # Fused keypoint + GCN head (wg@wo folded into wc in init_params),
    # then both sigmoids on the idle EUP slot.       -> 2 x (K, P)
    logits = dot(wc_ref[...], hid.astype(bf)) + bc_ref[...]
    K = num_keypoints
    heat_ref[...] = (1.0 / (1.0 + jnp.exp(-logits[:K, :]))).astype(heat_ref.dtype)
    gcn_ref[...] = (1.0 / (1.0 + jnp.exp(-logits[K:, :]))).astype(gcn_ref.dtype)


def pallas_hupr_fused(x, params, *, num_keypoints):
    """x: (B, Cin, P) bf16 channels-first.  Returns (heat, gcn), each (B, K, P)."""
    B, Cin, P = x.shape
    K = num_keypoints
    weights = [
        params["w_mnet"], params["b_mnet"],
        params["w_enc1"], params["b_enc1"], params["pool_a"],
        params["w_enc2"], params["b_enc2"], params["pool_b"],
        params["w_enc3"], params["b_enc3"],
        params["wh1"], params["wh2"], params["wh3"], params["bh"],
        params["up_b"], params["up_c"],
        params["w_comb"], params["b_comb"],
    ]
    # Weights are tiny; each is a single full-array block resident in VMEM.
    w_specs = [pl.BlockSpec(w.shape, lambda b: (0, 0)) for w in weights]

    return pl.pallas_call(
        functools.partial(_hupr_fused_kernel, num_keypoints=K),
        out_shape=(jax.ShapeDtypeStruct((B, K, P), jnp.float32),
                   jax.ShapeDtypeStruct((B, K, P), jnp.float32)),
        grid=(B,),
        in_specs=[pl.BlockSpec((None, Cin, P), lambda b: (b, 0, 0))] + w_specs,
        out_specs=(pl.BlockSpec((None, K, P), lambda b: (b, 0, 0)),
                   pl.BlockSpec((None, K, P), lambda b: (b, 0, 0))),
        compiler_params=pltpu.CompilerParams(
            dimension_semantics=("parallel",)),
    )(x, *weights)


# ----------------------------------------------------------------------------
# Parameters (deterministic synthetic init; ALL folds/packing done here)
# ----------------------------------------------------------------------------
def _block_diag(*blocks):
    rows = sum(b.shape[0] for b in blocks)
    cols = sum(b.shape[1] for b in blocks)
    out = jnp.zeros((rows, cols), blocks[0].dtype)
    r = c = 0
    for b in blocks:
        out = out.at[r:r + b.shape[0], c:c + b.shape[1]].set(b)
        r += b.shape[0]
        c += b.shape[1]
    return out


def init_params(key, cfg):
    F = cfg["numFrames"]; nf = cfg["numFilters"]; G = cfg["numGroupFrames"]
    E = cfg["elevationSize"]; R = cfg["rangeSize"]; A = cfg["azimuthSize"]
    C1, C2, C3 = cfg["c1"], cfg["c2"], cfg["c3"]
    K = cfg["numKeypoints"]; Dh = cfg["dhidden"]
    assert R == A
    bf = jnp.bfloat16

    keys = jax.random.split(key, 12)

    def w(k, shape, scale=0.05):
        return scale * jax.random.normal(k, shape, jnp.float32)

    # MNet stand-in: (2, F) chirp channels -> nf per pixel, with the elevation
    # mean of forward_chirp folded in (repeat rows E times, scale 1/E).
    # TODO(synk): MNet's exact Conv3D/MaxPool3D stack is not given in the source.
    def mnet_fold(wm):                       # (2F, nf) -> (nf, 2FE) channels-first
        return (jnp.repeat(wm, E, axis=0) / float(E)).T

    wm_h = mnet_fold(w(keys[0], (2 * F, nf)))
    wm_v = mnet_fold(w(keys[1], (2 * F, nf)))
    # block-diagonal over (view, group): contraction width 2*G*2*F*E
    w_mnet = _block_diag(*([wm_h] * G + [wm_v] * G))          # (2*G*nf, 2*G*2FE)
    b_mnet = jnp.zeros((2 * G * nf, 1), jnp.float32)

    # Encoder3D stand-in: 3 pointwise stages with 2x2 AVERAGE pools, both views
    # packed block-diagonally so they share each matmul.
    # TODO(synk): Encoder3D internals not given; if the real net uses MaxPool
    # the pixel-mixing-matmul pooling below must be replaced by an explicit max.
    w_enc1 = _block_diag(w(keys[2], (G * nf, C1)).T,
                         w(keys[3], (G * nf, C1)).T)          # (2C1, 2G*nf)
    w_enc2 = _block_diag(w(keys[4], (C1, C2)).T,
                         w(keys[5], (C1, C2)).T)              # (2C2, 2C1)
    w_enc3 = _block_diag(w(keys[6], (C2, C3)).T,
                         w(keys[7], (C2, C3)).T)              # (2C3, 2C2)
    b_enc1 = jnp.zeros((2 * C1, 1), jnp.float32)
    b_enc2 = jnp.zeros((2 * C2, 1), jnp.float32)
    b_enc3 = jnp.zeros((2 * C3, 1), jnp.float32)

    # 2x2 avg-pool / nearest-upsample as constant pixel-mixing matrices (MXU).
    def pool_mat(h):                          # (h*h, (h/2)*(h/2))
        fine = jnp.arange(h * h)
        r, a = fine // h, fine % h
        coarse = (r // 2) * (h // 2) + (a // 2)
        return jax.nn.one_hot(coarse, (h // 2) * (h // 2), dtype=jnp.float32) * 0.25

    def up_mat(hc, f):                        # (hc*hc, (hc*f)*(hc*f)) nearest
        hf = hc * f
        fine = jnp.arange(hf * hf)
        r, a = fine // hf, fine % hf
        coarse = (r // f) * hc + (a // f)
        return jax.nn.one_hot(coarse, hc * hc, dtype=jnp.float32).T

    pool_a = pool_mat(R)                      # 16x16 -> 8x8
    pool_b = pool_mat(R // 2)                 # 8x8  -> 4x4
    up_b = up_mat(R // 2, 2)                  # 8x8  -> 16x16
    up_c = up_mat(R // 4, 4)                  # 4x4  -> 16x16

    # Decoder stand-in: multi-scale hidden proj (split per scale), PReLU,
    # keypoint head + GCN mix with both sigmoids.  The GCN mix is folded into
    # the head here: Wcomb = [wo; wg@wo], bcomb = [bo; wg@bo + bg].
    # TODO(synk): MultiScaleCrossSelfAttentionPRGCN internals not given.
    wh1 = w(keys[8], (Dh, 2 * C1))
    wh2 = w(keys[9], (Dh, 2 * C2))
    wh3 = w(keys[10], (Dh, 2 * C3))
    bh = jnp.zeros((Dh, 1), jnp.float32)
    wo = w(keys[11], (K, Dh))
    wg = w(jax.random.fold_in(key, 99), (K, K))
    bo = jnp.zeros((K, 1), jnp.float32)
    bg = jnp.zeros((K, 1), jnp.float32)
    w_comb = jnp.concatenate([wo, wg @ wo], axis=0)           # (2K, Dh)
    b_comb = jnp.concatenate([bo, wg @ bo + bg], axis=0)      # (2K, 1)

    return {
        "w_mnet": w_mnet.astype(bf), "b_mnet": b_mnet,
        "w_enc1": w_enc1.astype(bf), "b_enc1": b_enc1, "pool_a": pool_a.astype(bf),
        "w_enc2": w_enc2.astype(bf), "b_enc2": b_enc2, "pool_b": pool_b.astype(bf),
        "w_enc3": w_enc3.astype(bf), "b_enc3": b_enc3,
        "wh1": wh1.astype(bf), "wh2": wh2.astype(bf), "wh3": wh3.astype(bf),
        "bh": bh,
        "up_b": up_b.astype(bf), "up_c": up_c.astype(bf),
        "w_comb": w_comb.astype(bf), "b_comb": b_comb,
    }


# ----------------------------------------------------------------------------
# HuPRNet forward (wrapper: only input layout plumbing + output reshape)
# ----------------------------------------------------------------------------
def hupr_forward(params, VRDAEmaps_hori, VRDAEmaps_vert, *, cfg):
    B = VRDAEmaps_hori.shape[0]
    G = cfg["numGroupFrames"]; F = cfg["numFrames"]
    R = cfg["rangeSize"]; A = cfg["azimuthSize"]; E = cfg["elevationSize"]
    H = cfg["heatmapSize"]; K = cfg["numKeypoints"]
    assert R == A == H, "toy config assumes square range/azimuth == heatmapSize"

    # Pack both views channels-first: (B, 2*G*2*F*E, R*A).  The elevation mean
    # of forward_chirp is folded into the block-diagonal MNet weights, so this
    # is the only XLA layout op before the fully fused kernel.
    x = jnp.stack([VRDAEmaps_hori, VRDAEmaps_vert], axis=1)    # (B,2,G,2,F,R,A,E)
    x = jnp.transpose(x, (0, 1, 2, 3, 4, 7, 5, 6))             # (B,2,G,2,F,E,R,A)
    x = x.reshape(B, 2 * G * 2 * F * E, R * A).astype(jnp.bfloat16)

    heat, gcn = pallas_hupr_fused(x, params, num_keypoints=K)  # (B, K, R*A) each

    heatmap = heat.reshape(B, K, H, H)[:, :, None, :, :]       # sigmoid(out).unsqueeze(2)
    gcn_heatmap = gcn.reshape(B, K, H, H)
    return heatmap, gcn_heatmap


# ----------------------------------------------------------------------------
# main
# ----------------------------------------------------------------------------
if __name__ == "__main__":
    cfg = dict(
        numFrames=4,        # chirps per frame
        numFilters=8,
        rangeSize=16,
        azimuthSize=16,
        elevationSize=4,
        numGroupFrames=4,
        heatmapSize=16,
        numKeypoints=8,
        c1=16, c2=32, c3=32,
        dhidden=64,
    )
    B = 2

    key = jax.random.PRNGKey(0)
    kx1, kx2, kp = jax.random.split(key, 3)
    in_shape = (B, cfg["numGroupFrames"], 2, cfg["numFrames"],
                cfg["rangeSize"], cfg["azimuthSize"], cfg["elevationSize"])
    VRDAEmaps_hori = jax.random.normal(kx1, in_shape, jnp.float32)
    VRDAEmaps_vert = jax.random.normal(kx2, in_shape, jnp.float32)

    params = init_params(kp, cfg)

    fwd = jax.jit(functools.partial(hupr_forward, cfg=cfg))
    heatmap, gcn_heatmap = fwd(params, VRDAEmaps_hori, VRDAEmaps_vert)
    jax.block_until_ready((heatmap, gcn_heatmap))

    assert heatmap.shape == (B, cfg["numKeypoints"], 1,
                             cfg["heatmapSize"], cfg["heatmapSize"]), heatmap.shape
    assert gcn_heatmap.shape == (B, cfg["numKeypoints"],
                                 cfg["heatmapSize"], cfg["heatmapSize"]), gcn_heatmap.shape
    assert bool(jnp.all(jnp.isfinite(heatmap))) and bool(jnp.all(jnp.isfinite(gcn_heatmap)))
    assert bool(jnp.all((heatmap >= 0) & (heatmap <= 1)))

    print("KERNEL_OK")
</pallas_src>

<mosaic_0001>
module attributes {stable_mosaic.version = 11 : i64} {
  func.func @_hupr_fused_kernel(%arg0: i32, %arg1: memref<1x256x256xbf16, #tpu.memory_space<vmem>>, %arg2: memref<64x256xbf16, #tpu.memory_space<vmem>>, %arg3: memref<64x1xf32, #tpu.memory_space<vmem>>, %arg4: memref<32x64xbf16, #tpu.memory_space<vmem>>, %arg5: memref<32x1xf32, #tpu.memory_space<vmem>>, %arg6: memref<256x64xbf16, #tpu.memory_space<vmem>>, %arg7: memref<64x32xbf16, #tpu.memory_space<vmem>>, %arg8: memref<64x1xf32, #tpu.memory_space<vmem>>, %arg9: memref<64x16xbf16, #tpu.memory_space<vmem>>, %arg10: memref<64x64xbf16, #tpu.memory_space<vmem>>, %arg11: memref<64x1xf32, #tpu.memory_space<vmem>>, %arg12: memref<64x32xbf16, #tpu.memory_space<vmem>>, %arg13: memref<64x64xbf16, #tpu.memory_space<vmem>>, %arg14: memref<64x64xbf16, #tpu.memory_space<vmem>>, %arg15: memref<64x1xf32, #tpu.memory_space<vmem>>, %arg16: memref<64x256xbf16, #tpu.memory_space<vmem>>, %arg17: memref<16x256xbf16, #tpu.memory_space<vmem>>, %arg18: memref<16x64xbf16, #tpu.memory_space<vmem>>, %arg19: memref<16x1xf32, #tpu.memory_space<vmem>>, %arg20: memref<1x8x256xf32, #tpu.memory_space<vmem>>, %arg21: memref<1x8x256xf32, #tpu.memory_space<vmem>>) attributes {dimension_semantics = [#tpu.dimension_semantics<parallel>], iteration_bounds = array<i64: 2>, scalar_prefetch = 0 : i64, scratch_operands = 0 : i64, tpu.core_type = #tpu.core_type<tc>, window_params = [{transform_indices = @transform_0, window_bounds = array<i64: 1, 256, 256>}, {pipeline_mode = #tpu.pipeline_mode<synchronous>, transform_indices = @transform_1, window_bounds = array<i64: 64, 256>}, {pipeline_mode = #tpu.pipeline_mode<synchronous>, transform_indices = @transform_2, window_bounds = array<i64: 64, 1>}, {pipeline_mode = #tpu.pipeline_mode<synchronous>, transform_indices = @transform_3, window_bounds = array<i64: 32, 64>}, {pipeline_mode = #tpu.pipeline_mode<synchronous>, transform_indices = @transform_4, window_bounds = array<i64: 32, 1>}, {pipeline_mode = #tpu.pipeline_mode<synchronous>, transform_indices = @transform_5, window_bounds = array<i64: 256, 64>}, {pipeline_mode = #tpu.pipeline_mode<synchronous>, transform_indices = @transform_6, window_bounds = array<i64: 64, 32>}, {pipeline_mode = #tpu.pipeline_mode<synchronous>, transform_indices = @transform_7, window_bounds = array<i64: 64, 1>}, {pipeline_mode = #tpu.pipeline_mode<synchronous>, transform_indices = @transform_8, window_bounds = array<i64: 64, 16>}, {pipeline_mode = #tpu.pipeline_mode<synchronous>, transform_indices = @transform_9, window_bounds = array<i64: 64, 64>}, {pipeline_mode = #tpu.pipeline_mode<synchronous>, transform_indices = @transform_10, window_bounds = array<i64: 64, 1>}, {pipeline_mode = #tpu.pipeline_mode<synchronous>, transform_indices = @transform_11, window_bounds = array<i64: 64, 32>}, {pipeline_mode = #tpu.pipeline_mode<synchronous>, transform_indices = @transform_12, window_bounds = array<i64: 64, 64>}, {pipeline_mode = #tpu.pipeline_mode<synchronous>, transform_indices = @transform_13, window_bounds = array<i64: 64, 64>}, {pipeline_mode = #tpu.pipeline_mode<synchronous>, transform_indices = @transform_14, window_bounds = array<i64: 64, 1>}, {pipeline_mode = #tpu.pipeline_mode<synchronous>, transform_indices = @transform_15, window_bounds = array<i64: 64, 256>}, {pipeline_mode = #tpu.pipeline_mode<synchronous>, transform_indices = @transform_16, window_bounds = array<i64: 16, 256>}, {pipeline_mode = #tpu.pipeline_mode<synchronous>, transform_indices = @transform_17, window_bounds = array<i64: 16, 64>}, {pipeline_mode = #tpu.pipeline_mode<synchronous>, transform_indices = @transform_18, window_bounds = array<i64: 16, 1>}, {transform_indices = @transform_19, window_bounds = array<i64: 1, 8, 256>}, {transform_indices = @transform_20, window_bounds = array<i64: 1, 8, 256>}]} {
    %c0 = arith.constant 0 : index
    %c0_0 = arith.constant 0 : index
    %0 = vector.load %arg2[%c0, %c0_0] : memref<64x256xbf16, #tpu.memory_space<vmem>>, vector<64x256xbf16>
    %c0_1 = arith.constant 0 : index
    %c0_2 = arith.constant 0 : index
    %c0_3 = arith.constant 0 : index
    %1 = vector.load %arg1[%c0_1, %c0_2, %c0_3] : memref<1x256x256xbf16, #tpu.memory_space<vmem>>, vector<1x256x256xbf16>
    %2 = vector.shape_cast %1 : vector<1x256x256xbf16> to vector<256x256xbf16>
    %cst = arith.constant dense<0.000000e+00> : vector<64x256xf32>
    %3 = tpu.matmul %0, %2, %cst {dimension_numbers = #tpu.dot_dimension_numbers<[1], [0], [0], [1], [0, 0, 1, 1], [], []>} : vector<64x256xbf16>, vector<256x256xbf16>, vector<64x256xf32> -> vector<64x256xf32>
    %c0_4 = arith.constant 0 : index
    %c0_5 = arith.constant 0 : index
    %4 = vector.load %arg3[%c0_4, %c0_5] : memref<64x1xf32, #tpu.memory_space<vmem>>, vector<64x1xf32>
    %5 = vector.broadcast %4 : vector<64x1xf32> to vector<64x256xf32>
    %6 = arith.addf %3, %5 : vector<64x256xf32>
    %cst_6 = arith.constant 0.000000e+00 : f32
    %7 = vector.broadcast %cst_6 : f32 to vector<64x256xf32>
    %8 = arith.maximumf %6, %7 : vector<64x256xf32>
    %c0_7 = arith.constant 0 : index
    %c0_8 = arith.constant 0 : index
    %9 = vector.load %arg4[%c0_7, %c0_8] : memref<32x64xbf16, #tpu.memory_space<vmem>>, vector<32x64xbf16>
    %10 = arith.truncf %8 : vector<64x256xf32> to vector<64x256xbf16>
    %cst_9 = arith.constant dense<0.000000e+00> : vector<32x256xf32>
    %11 = tpu.matmul %9, %10, %cst_9 {dimension_numbers = #tpu.dot_dimension_numbers<[1], [0], [0], [1], [0, 0, 1, 1], [], []>} : vector<32x64xbf16>, vector<64x256xbf16>, vector<32x256xf32> -> vector<32x256xf32>
    %c0_10 = arith.constant 0 : index
    %c0_11 = arith.constant 0 : index
    %12 = vector.load %arg5[%c0_10, %c0_11] : memref<32x1xf32, #tpu.memory_space<vmem>>, vector<32x1xf32>
    %13 = vector.broadcast %12 : vector<32x1xf32> to vector<32x256xf32>
    %14 = arith.addf %11, %13 : vector<32x256xf32>
    %cst_12 = arith.constant 0.000000e+00 : f32
    %15 = vector.broadcast %cst_12 : f32 to vector<32x256xf32>
    %16 = arith.maximumf %14, %15 : vector<32x256xf32>
    %17 = arith.truncf %16 : vector<32x256xf32> to vector<32x256xbf16>
    %c0_13 = arith.constant 0 : index
    %c0_14 = arith.constant 0 : index
    %18 = vector.load %arg6[%c0_13, %c0_14] : memref<256x64xbf16, #tpu.memory_space<vmem>>, vector<256x64xbf16>
    %cst_15 = arith.constant dense<0.000000e+00> : vector<32x64xf32>
    %19 = tpu.matmul %17, %18, %cst_15 {dimension_numbers = #tpu.dot_dimension_numbers<[1], [0], [0], [1], [0, 0, 1, 1], [], []>} : vector<32x256xbf16>, vector<256x64xbf16>, vector<32x64xf32> -> vector<32x64xf32>
    %20 = arith.truncf %19 : vector<32x64xf32> to vector<32x64xbf16>
    %c0_16 = arith.constant 0 : index
    %c0_17 = arith.constant 0 : index
    %21 = vector.load %arg7[%c0_16, %c0_17] : memref<64x32xbf16, #tpu.memory_space<vmem>>, vector<64x32xbf16>
    %cst_18 = arith.constant dense<0.000000e+00> : vector<64x64xf32>
    %22 = tpu.matmul %21, %20, %cst_18 {dimension_numbers = #tpu.dot_dimension_numbers<[1], [0], [0], [1], [0, 0, 1, 1], [], []>} : vector<64x32xbf16>, vector<32x64xbf16>, vector<64x64xf32> -> vector<64x64xf32>
    %c0_19 = arith.constant 0 : index
    %c0_20 = arith.constant 0 : index
    %23 = vector.load %arg8[%c0_19, %c0_20] : memref<64x1xf32, #tpu.memory_space<vmem>>, vector<64x1xf32>
    %24 = vector.broadcast %23 : vector<64x1xf32> to vector<64x64xf32>
    %25 = arith.addf %22, %24 : vector<64x64xf32>
    %cst_21 = arith.constant 0.000000e+00 : f32
    %26 = vector.broadcast %cst_21 : f32 to vector<64x64xf32>
    %27 = arith.maximumf %25, %26 : vector<64x64xf32>
    %28 = arith.truncf %27 : vector<64x64xf32> to vector<64x64xbf16>
    %c0_22 = arith.constant 0 : index
    %c0_23 = arith.constant 0 : index
    %29 = vector.load %arg9[%c0_22, %c0_23] : memref<64x16xbf16, #tpu.memory_space<vmem>>, vector<64x16xbf16>
    %cst_24 = arith.constant dense<0.000000e+00> : vector<64x16xf32>
    %30 = tpu.matmul %28, %29, %cst_24 {dimension_numbers = #tpu.dot_dimension_numbers<[1], [0], [0], [1], [0, 0, 1, 1], [], []>} : vector<64x64xbf16>, vector<64x16xbf16>, vector<64x16xf32> -> vector<64x16xf32>
    %31 = arith.truncf %30 : vector<64x16xf32> to vector<64x16xbf16>
    %c0_25 = arith.constant 0 : index
    %c0_26 = arith.constant 0 : index
    %32 = vector.load %arg10[%c0_25, %c0_26] : memref<64x64xbf16, #tpu.memory_space<vmem>>, vector<64x64xbf16>
    %cst_27 = arith.constant dense<0.000000e+00> : vector<64x16xf32>
    %33 = tpu.matmul %32, %31, %cst_27 {dimension_numbers = #tpu.dot_dimension_numbers<[1], [0], [0], [1], [0, 0, 1, 1], [], []>} : vector<64x64xbf16>, vector<64x16xbf16>, vector<64x16xf32> -> vector<64x16xf32>
    %c0_28 = arith.constant 0 : index
    %c0_29 = arith.constant 0 : index
    %34 = vector.load %arg11[%c0_28, %c0_29] : memref<64x1xf32, #tpu.memory_space<vmem>>, vector<64x1xf32>
    %35 = vector.broadcast %34 : vector<64x1xf32> to vector<64x16xf32>
    %36 = arith.addf %33, %35 : vector<64x16xf32>
    %cst_30 = arith.constant 0.000000e+00 : f32
    %37 = vector.broadcast %cst_30 : f32 to vector<64x16xf32>
    %38 = arith.maximumf %36, %37 : vector<64x16xf32>
    %39 = arith.truncf %38 : vector<64x16xf32> to vector<64x16xbf16>
    %c0_31 = arith.constant 0 : index
    %c0_32 = arith.constant 0 : index
    %40 = vector.load %arg12[%c0_31, %c0_32] : memref<64x32xbf16, #tpu.memory_space<vmem>>, vector<64x32xbf16>
    %cst_33 = arith.constant dense<0.000000e+00> : vector<64x256xf32>
    %41 = tpu.matmul %40, %17, %cst_33 {dimension_numbers = #tpu.dot_dimension_numbers<[1], [0], [0], [1], [0, 0, 1, 1], [], []>} : vector<64x32xbf16>, vector<32x256xbf16>, vector<64x256xf32> -> vector<64x256xf32>
    %c0_34 = arith.constant 0 : index
    %c0_35 = arith.constant 0 : index
    %42 = vector.load %arg13[%c0_34, %c0_35] : memref<64x64xbf16, #tpu.memory_space<vmem>>, vector<64x64xbf16>
    %cst_36 = arith.constant dense<0.000000e+00> : vector<64x64xf32>
    %43 = tpu.matmul %42, %28, %cst_36 {dimension_numbers = #tpu.dot_dimension_numbers<[1], [0], [0], [1], [0, 0, 1, 1], [], []>} : vector<64x64xbf16>, vector<64x64xbf16>, vector<64x64xf32> -> vector<64x64xf32>
    %44 = arith.truncf %43 : vector<64x64xf32> to vector<64x64xbf16>
    %c0_37 = arith.constant 0 : index
    %c0_38 = arith.constant 0 : index
    %45 = vector.load %arg16[%c0_37, %c0_38] : memref<64x256xbf16, #tpu.memory_space<vmem>>, vector<64x256xbf16>
    %cst_39 = arith.constant dense<0.000000e+00> : vector<64x256xf32>
    %46 = tpu.matmul %44, %45, %cst_39 {dimension_numbers = #tpu.dot_dimension_numbers<[1], [0], [0], [1], [0, 0, 1, 1], [], []>} : vector<64x64xbf16>, vector<64x256xbf16>, vector<64x256xf32> -> vector<64x256xf32>
    %47 = arith.addf %41, %46 : vector<64x256xf32>
    %c0_40 = arith.constant 0 : index
    %c0_41 = arith.constant 0 : index
    %48 = vector.load %arg14[%c0_40, %c0_41] : memref<64x64xbf16, #tpu.memory_space<vmem>>, vector<64x64xbf16>
    %cst_42 = arith.constant dense<0.000000e+00> : vector<64x16xf32>
    %49 = tpu.matmul %48, %39, %cst_42 {dimension_numbers = #tpu.dot_dimension_numbers<[1], [0], [0], [1], [0, 0, 1, 1], [], []>} : vector<64x64xbf16>, vector<64x16xbf16>, vector<64x16xf32> -> vector<64x16xf32>
    %50 = arith.truncf %49 : vector<64x16xf32> to vector<64x16xbf16>
    %c0_43 = arith.constant 0 : index
    %c0_44 = arith.constant 0 : index
    %51 = vector.load %arg17[%c0_43, %c0_44] : memref<16x256xbf16, #tpu.memory_space<vmem>>, vector<16x256xbf16>
    %cst_45 = arith.constant dense<0.000000e+00> : vector<64x256xf32>
    %52 = tpu.matmul %50, %51, %cst_45 {dimension_numbers = #tpu.dot_dimension_numbers<[1], [0], [0], [1], [0, 0, 1, 1], [], []>} : vector<64x16xbf16>, vector<16x256xbf16>, vector<64x256xf32> -> vector<64x256xf32>
    %53 = arith.addf %47, %52 : vector<64x256xf32>
    %c0_46 = arith.constant 0 : index
    %c0_47 = arith.constant 0 : index
    %54 = vector.load %arg15[%c0_46, %c0_47] : memref<64x1xf32, #tpu.memory_space<vmem>>, vector<64x1xf32>
    %55 = vector.broadcast %54 : vector<64x1xf32> to vector<64x256xf32>
    %56 = arith.addf %53, %55 : vector<64x256xf32>
    %cst_48 = arith.constant 0.000000e+00 : f32
    %57 = vector.broadcast %cst_48 : f32 to vector<64x256xf32>
    %58 = arith.cmpf oge, %56, %57 : vector<64x256xf32>
    %cst_49 = arith.constant 2.500000e-01 : f32
    %59 = vector.broadcast %cst_49 : f32 to vector<64x256xf32>
    %60 = arith.mulf %59, %56 : vector<64x256xf32>
    %61 = arith.select %58, %56, %60 : vector<64x256xi1>, vector<64x256xf32>
    %c0_50 = arith.constant 0 : index
    %c0_51 = arith.constant 0 : index
    %62 = vector.load %arg18[%c0_50, %c0_51] : memref<16x64xbf16, #tpu.memory_space<vmem>>, vector<16x64xbf16>
    %63 = arith.truncf %61 : vector<64x256xf32> to vector<64x256xbf16>
    %cst_52 = arith.constant dense<0.000000e+00> : vector<16x256xf32>
    %64 = tpu.matmul %62, %63, %cst_52 {dimension_numbers = #tpu.dot_dimension_numbers<[1], [0], [0], [1], [0, 0, 1, 1], [], []>} : vector<16x64xbf16>, vector<64x256xbf16>, vector<16x256xf32> -> vector<16x256xf32>
    %c0_53 = arith.constant 0 : index
    %c0_54 = arith.constant 0 : index
    %65 = vector.load %arg19[%c0_53, %c0_54] : memref<16x1xf32, #tpu.memory_space<vmem>>, vector<16x1xf32>
    %66 = vector.broadcast %65 : vector<16x1xf32> to vector<16x256xf32>
    %67 = arith.addf %64, %66 : vector<16x256xf32>
    %68 = vector.extract_strided_slice %67 {offsets = [0, 0], sizes = [8, 256], strides = [1, 1]} : vector<16x256xf32> to vector<8x256xf32>
    %cst_55 = arith.constant 0.000000e+00 : f32
    %69 = vector.broadcast %cst_55 : f32 to vector<8x256xf32>
    %70 = arith.subf %69, %68 : vector<8x256xf32>
    %71 = math.exp %70 : vector<8x256xf32>
    %cst_56 = arith.constant 1.000000e+00 : f32
    %72 = vector.broadcast %cst_56 : f32 to vector<8x256xf32>
    %73 = arith.addf %72, %71 : vector<8x256xf32>
    %cst_57 = arith.constant 1.000000e+00 : f32
    %74 = vector.broadcast %cst_57 : f32 to vector<8x256xf32>
    %75 = arith.divf %74, %73 : vector<8x256xf32>
    %c0_58 = arith.constant 0 : index
    %c0_59 = arith.constant 0 : index
    %c0_60 = arith.constant 0 : index
    %76 = vector.load %arg20[%c0_58, %c0_59, %c0_60] : memref<1x8x256xf32, #tpu.memory_space<vmem>>, vector<1x8x256xf32>
    %77 = vector.shape_cast %76 : vector<1x8x256xf32> to vector<8x256xf32>
    %78 = vector.shape_cast %75 : vector<8x256xf32> to vector<1x8x256xf32>
    tpu.vector_store %arg20[%c0_58, %c0_59, %c0_60], %78 {strides = array<i32>} : memref<1x8x256xf32, #tpu.memory_space<vmem>>, vector<1x8x256xf32>,
    %79 = vector.extract_strided_slice %67 {offsets = [8, 0], sizes = [8, 256], strides = [1, 1]} : vector<16x256xf32> to vector<8x256xf32>
    %cst_61 = arith.constant 0.000000e+00 : f32
    %80 = vector.broadcast %cst_61 : f32 to vector<8x256xf32>
    %81 = arith.subf %80, %79 : vector<8x256xf32>
    %82 = math.exp %81 : vector<8x256xf32>
    %cst_62 = arith.constant 1.000000e+00 : f32
    %83 = vector.broadcast %cst_62 : f32 to vector<8x256xf32>
    %84 = arith.addf %83, %82 : vector<8x256xf32>
    %cst_63 = arith.constant 1.000000e+00 : f32
    %85 = vector.broadcast %cst_63 : f32 to vector<8x256xf32>
    %86 = arith.divf %85, %84 : vector<8x256xf32>
    %c0_64 = arith.constant 0 : index
    %c0_65 = arith.constant 0 : index
    %c0_66 = arith.constant 0 : index
    %87 = vector.load %arg21[%c0_64, %c0_65, %c0_66] : memref<1x8x256xf32, #tpu.memory_space<vmem>>, vector<1x8x256xf32>
    %88 = vector.shape_cast %87 : vector<1x8x256xf32> to vector<8x256xf32>
    %89 = vector.shape_cast %86 : vector<8x256xf32> to vector<1x8x256xf32>
    tpu.vector_store %arg21[%c0_64, %c0_65, %c0_66], %89 {strides = array<i32>} : memref<1x8x256xf32, #tpu.memory_space<vmem>>, vector<1x8x256xf32>,
    return
  }
  func.func @transform_0(%arg0: i32) -> (i32, i32, i32) {
    %c0_i32 = arith.constant 0 : i32
    %c0_i32_0 = arith.constant 0 : i32
    %c0_i32_1 = arith.constant 0 : i32
    return %arg0, %c0_i32, %c0_i32_0 : i32, i32, i32
  }
  func.func @transform_1(%arg0: i32) -> (i32, i32) {
    %c0_i32 = arith.constant 0 : i32
    %c0_i32_0 = arith.constant 0 : i32
    %c0_i32_1 = arith.constant 0 : i32
    return %c0_i32, %c0_i32_0 : i32, i32
  }
  func.func @transform_2(%arg0: i32) -> (i32, i32) {
    %c0_i32 = arith.constant 0 : i32
    %c0_i32_0 = arith.constant 0 : i32
    %c0_i32_1 = arith.constant 0 : i32
    return %c0_i32, %c0_i32_0 : i32, i32
  }
  func.func @transform_3(%arg0: i32) -> (i32, i32) {
    %c0_i32 = arith.constant 0 : i32
    %c0_i32_0 = arith.constant 0 : i32
    %c0_i32_1 = arith.constant 0 : i32
    return %c0_i32, %c0_i32_0 : i32, i32
  }
  func.func @transform_4(%arg0: i32) -> (i32, i32) {
    %c0_i32 = arith.constant 0 : i32
    %c0_i32_0 = arith.constant 0 : i32
    %c0_i32_1 = arith.constant 0 : i32
    return %c0_i32, %c0_i32_0 : i32, i32
  }
  func.func @transform_5(%arg0: i32) -> (i32, i32) {
    %c0_i32 = arith.constant 0 : i32
    %c0_i32_0 = arith.constant 0 : i32
    %c0_i32_1 = arith.constant 0 : i32
    return %c0_i32, %c0_i32_0 : i32, i32
  }
  func.func @transform_6(%arg0: i32) -> (i32, i32) {
    %c0_i32 = arith.constant 0 : i32
    %c0_i32_0 = arith.constant 0 : i32
    %c0_i32_1 = arith.constant 0 : i32
    return %c0_i32, %c0_i32_0 : i32, i32
  }
  func.func @transform_7(%arg0: i32) -> (i32, i32) {
    %c0_i32 = arith.constant 0 : i32
    %c0_i32_0 = arith.constant 0 : i32
    %c0_i32_1 = arith.constant 0 : i32
    return %c0_i32, %c0_i32_0 : i32, i32
  }
  func.func @transform_8(%arg0: i32) -> (i32, i32) {
    %c0_i32 = arith.constant 0 : i32
    %c0_i32_0 = arith.constant 0 : i32
    %c0_i32_1 = arith.constant 0 : i32
    return %c0_i32, %c0_i32_0 : i32, i32
  }
  func.func @transform_9(%arg0: i32) -> (i32, i32) {
    %c0_i32 = arith.constant 0 : i32
    %c0_i32_0 = arith.constant 0 : i32
    %c0_i32_1 = arith.constant 0 : i32
    return %c0_i32, %c0_i32_0 : i32, i32
  }
  func.func @transform_10(%arg0: i32) -> (i32, i32) {
    %c0_i32 = arith.constant 0 : i32
    %c0_i32_0 = arith.constant 0 : i32
    %c0_i32_1 = arith.constant 0 : i32
    return %c0_i32, %c0_i32_0 : i32, i32
  }
  func.func @transform_11(%arg0: i32) -> (i32, i32) {
    %c0_i32 = arith.constant 0 : i32
    %c0_i32_0 = arith.constant 0 : i32
    %c0_i32_1 = arith.constant 0 : i32
    return %c0_i32, %c0_i32_0 : i32, i32
  }
  func.func @transform_12(%arg0: i32) -> (i32, i32) {
    %c0_i32 = arith.constant 0 : i32
    %c0_i32_0 = arith.constant 0 : i32
    %c0_i32_1 = arith.constant 0 : i32
    return %c0_i32, %c0_i32_0 : i32, i32
  }
  func.func @transform_13(%arg0: i32) -> (i32, i32) {
    %c0_i32 = arith.constant 0 : i32
    %c0_i32_0 = arith.constant 0 : i32
    %c0_i32_1 = arith.constant 0 : i32
    return %c0_i32, %c0_i32_0 : i32, i32
  }
  func.func @transform_14(%arg0: i32) -> (i32, i32) {
    %c0_i32 = arith.constant 0 : i32
    %c0_i32_0 = arith.constant 0 : i32
    %c0_i32_1 = arith.constant 0 : i32
    return %c0_i32, %c0_i32_0 : i32, i32
  }
  func.func @transform_15(%arg0: i32) -> (i32, i32) {
    %c0_i32 = arith.constant 0 : i32
    %c0_i32_0 = arith.constant 0 : i32
    %c0_i32_1 = arith.constant 0 : i32
    return %c0_i32, %c0_i32_0 : i32, i32
  }
  func.func @transform_16(%arg0: i32) -> (i32, i32) {
    %c0_i32 = arith.constant 0 : i32
    %c0_i32_0 = arith.constant 0 : i32
    %c0_i32_1 = arith.constant 0 : i32
    return %c0_i32, %c0_i32_0 : i32, i32
  }
  func.func @transform_17(%arg0: i32) -> (i32, i32) {
    %c0_i32 = arith.constant 0 : i32
    %c0_i32_0 = arith.constant 0 : i32
    %c0_i32_1 = arith.constant 0 : i32
    return %c0_i32, %c0_i32_0 : i32, i32
  }
  func.func @transform_18(%arg0: i32) -> (i32, i32) {
    %c0_i32 = arith.constant 0 : i32
    %c0_i32_0 = arith.constant 0 : i32
    %c0_i32_1 = arith.constant 0 : i32
    return %c0_i32, %c0_i32_0 : i32, i32
  }
  func.func @transform_19(%arg0: i32) -> (i32, i32, i32) {
    %c0_i32 = arith.constant 0 : i32
    %c0_i32_0 = arith.constant 0 : i32
    %c0_i32_1 = arith.constant 0 : i32
    return %arg0, %c0_i32, %c0_i32_0 : i32, i32, i32
  }
  func.func @transform_20(%arg0: i32) -> (i32, i32, i32) {
    %c0_i32 = arith.constant 0 : i32
    %c0_i32_0 = arith.constant 0 : i32
    %c0_i32_1 = arith.constant 0 : i32
    return %arg0, %c0_i32, %c0_i32_0 : i32, i32, i32
  }
}

</mosaic_0001>

<llo_original>
// kernel: hupr_forward.1
$region0: #{hupr_forward.1}
  #allocation0 [shape = 'u32[]', space=smem, size = 0x4, offset = 0x4, fixed_abs, tag = 'smem constant byte address 0x4 - core index']
  #allocation1 [shape = 'u32[72,128]{1,0:T(1,128)}', space=vmem, size = 0x9000, scoped, tag = 'internal scratch']
  %s0 = inlined_call_operand.vmem [shape: bf16[2,256,256], index: 0, kind: input, shape index: {}]
  %s1 = inlined_call_operand.vmem [shape: bf16[64,256], index: 1, kind: input, shape index: {}]
  %s2 = inlined_call_operand.vmem [shape: f32[64,1], index: 2, kind: input, shape index: {}]
  %s3 = inlined_call_operand.vmem [shape: bf16[32,64], index: 3, kind: input, shape index: {}]
  %s4 = inlined_call_operand.vmem [shape: f32[32,1], index: 4, kind: input, shape index: {}]
  %s5 = inlined_call_operand.vmem [shape: bf16[256,64], index: 5, kind: input, shape index: {}]
  %s6 = inlined_call_operand.vmem [shape: bf16[64,32], index: 6, kind: input, shape index: {}]
  %s7 = inlined_call_operand.vmem [shape: f32[64,1], index: 7, kind: input, shape index: {}]
  %s8 = inlined_call_operand.vmem [shape: bf16[64,16], index: 8, kind: input, shape index: {}]
  %s9 = inlined_call_operand.vmem [shape: bf16[64,64], index: 9, kind: input, shape index: {}]
  %s10 = inlined_call_operand.vmem [shape: f32[64,1], index: 10, kind: input, shape index: {}]
  %s11 = inlined_call_operand.vmem [shape: bf16[64,32], index: 11, kind: input, shape index: {}]
  %s12 = inlined_call_operand.vmem [shape: bf16[64,64], index: 12, kind: input, shape index: {}]
  %s13 = inlined_call_operand.vmem [shape: bf16[64,64], index: 13, kind: input, shape index: {}]
  %s14 = inlined_call_operand.vmem [shape: f32[64,1], index: 14, kind: input, shape index: {}]
  %s15 = inlined_call_operand.vmem [shape: bf16[64,256], index: 15, kind: input, shape index: {}]
  %s16 = inlined_call_operand.vmem [shape: bf16[16,256], index: 16, kind: input, shape index: {}]
  %s17 = inlined_call_operand.vmem [shape: bf16[16,64], index: 17, kind: input, shape index: {}]
  %s18 = inlined_call_operand.vmem [shape: f32[16,1], index: 18, kind: input, shape index: {}]
  %s19 = inlined_call_operand.vmem [shape: f32[2,8,256], index: 19, kind: output, shape index: {0}]
  %s20 = inlined_call_operand.vmem [shape: f32[2,8,256], index: 20, kind: output, shape index: {1}]
  %21 = xla_tuple %s19, %s20
  %s22 = sld [smem:[#allocation0]]
  $region117: #{hupr_forward.1} parent=0
    _
  %s24 = ssub.s32 1, %s22
  %s25 = scalar_select 0, %s24, %s22
  loop: start=0, step=1, limit=4
  $region2: #{hupr_forward.1} parent=0 // loop_pre_header
    _
  $region3: #{hupr_forward.1} parent=0 // loop_header
    %s27 = sphi 0, %s31
    %p28 = scmp.ge.s32.totalorder %s27, 4
    %s37 = sphi 0, %s39
    %s40 = sphi 0, %s37
    %s41 = sphi 0, %s40
    %s57 = sphi 0, %s41
    %s61 = sphi 0, %s61
    %s63 = sphi 0, %s61
    %s64 = sphi 0, %s63
    %s78 = sphi 0, %s64
    %s82 = sphi 0, %s82
    %s84 = sphi 0, %s82
    %s85 = sphi 0, %s84
    %s99 = sphi 0, %s85
    %s103 = sphi 0, %s103
    %s105 = sphi 0, %s103
    %s106 = sphi 0, %s105
    %s120 = sphi 0, %s106
    %s124 = sphi 0, %s124
    %s126 = sphi 0, %s124
    %s127 = sphi 0, %s126
    %s141 = sphi 0, %s127
    %s145 = sphi 0, %s145
    %s147 = sphi 0, %s145
    %s148 = sphi 0, %s147
    %s162 = sphi 0, %s148
    %s166 = sphi 0, %s166
    %s168 = sphi 0, %s166
    %s169 = sphi 0, %s168
    %s183 = sphi 0, %s169
    %s187 = sphi 0, %s187
    %s189 = sphi 0, %s187
    %s190 = sphi 0, %s189
    %s204 = sphi 0, %s190
    %s208 = sphi 0, %s208
    %s210 = sphi 0, %s208
    %s211 = sphi 0, %s210
    %s225 = sphi 0, %s211
    %s229 = sphi 0, %s229
    %s231 = sphi 0, %s229
    %s232 = sphi 0, %s231
    %s246 = sphi 0, %s232
    %s250 = sphi 0, %s250
    %s252 = sphi 0, %s250
    %s253 = sphi 0, %s252
    %s267 = sphi 0, %s253
    %s271 = sphi 0, %s271
    %s273 = sphi 0, %s271
    %s274 = sphi 0, %s273
    %s288 = sphi 0, %s274
    %s292 = sphi 0, %s292
    %s294 = sphi 0, %s292
    %s295 = sphi 0, %s294
    %s309 = sphi 0, %s295
    %s313 = sphi 0, %s313
    %s315 = sphi 0, %s313
    %s316 = sphi 0, %s315
    %s330 = sphi 0, %s316
    %s334 = sphi 0, %s334
    %s336 = sphi 0, %s334
    %s337 = sphi 0, %s336
    %s351 = sphi 0, %s337
    %s355 = sphi 0, %s355
    %s357 = sphi 0, %s355
    %s358 = sphi 0, %s357
    %s372 = sphi 0, %s358
    %s376 = sphi 0, %s376
    %s378 = sphi 0, %s376
    %s379 = sphi 0, %s378
    %s393 = sphi 0, %s379
    %s397 = sphi 0, %s397
    %s399 = sphi 0, %s397
    %s400 = sphi 0, %s399
    %s414 = sphi 0, %s400
    %s418 = sphi 0, %s418
    %s420 = sphi 0, %s418
    %s421 = sphi 0, %s420
    %s435 = sphi 0, %s421
    %s441 = sphi 0, %s443
    %s444 = sphi 0, %s441
    %s445 = sphi 0, %s444
    %s461 = sphi 0, %s445
    %s467 = sphi 0, %s469
    %s470 = sphi 0, %s467
    %s471 = sphi 0, %s470
    %s487 = sphi 0, %s471
  $region4: #{hupr_forward.1} parent=0 // loop_header_branch
    %30 = sbr.rel (%p28) target = $region8
  $region5: #{hupr_forward.1} parent=0 // loop_body
    %s32 = ssub.s32 %s27, 1
    %s33 = ssub.s32 %s27, 2
    %s34 = sadd.s32 %s27, 1
    %s35 = ssub.s32 %s27, %s34
    %p36 = scmp.eq.s32.totalorder %s35, 0
    %s38 = sadd.s32 %s37, 1
    %s39 = scalar_select %p36, %s37, %s38
    %p42 = pneg %p36
    %p43 = scmp.eq.s32.totalorder %s27, 1
    %p44 = por %p42, %p43
    %p45 = scmp.ne.s32.totalorder %s37, %s40
    %p46 = scmp.eq.s32.totalorder %s27, 0
    %p47 = por %p45, %p46
    %p48 = scmp.ne.s32.totalorder %s37, %s40
    %p49 = scmp.eq.s32.totalorder %s32, 1
    %p50 = por %p48, %p49
    %p51 = scmp.ne.s32.totalorder %s40, %s41
    %p52 = scmp.eq.s32.totalorder %s32, 0
    %p53 = por %p51, %p52
    %p54 = scmp.ne.s32.totalorder %s40, %s41
    %p55 = scmp.eq.s32.totalorder %s33, 1
    %p56 = por %p54, %p55
    %p58 = scmp.ne.s32.totalorder %s41, %s57
    %p59 = scmp.eq.s32.totalorder %s33, 0
    %p60 = por %p58, %p59
    %s62 = sadd.s32 %s61, 1
    %p65 = scmp.eq.s32.totalorder %s27, 1
    %p66 = scmp.ne.s32.totalorder %s61, %s63
    %p67 = scmp.eq.s32.totalorder %s27, 0
    %p68 = por %p66, %p67
    %p69 = scmp.ne.s32.totalorder %s61, %s63
    %p70 = scmp.eq.s32.totalorder %s32, 1
    %p71 = por %p69, %p70
    %p72 = scmp.ne.s32.totalorder %s63, %s64
    %p73 = scmp.eq.s32.totalorder %s32, 0
    %p74 = por %p72, %p73
    %p75 = scmp.ne.s32.totalorder %s63, %s64
    %p76 = scmp.eq.s32.totalorder %s33, 1
    %p77 = por %p75, %p76
    %p79 = scmp.ne.s32.totalorder %s64, %s78
    %p80 = scmp.eq.s32.totalorder %s33, 0
    %p81 = por %p79, %p80
    %s83 = sadd.s32 %s82, 1
    %p86 = scmp.eq.s32.totalorder %s27, 1
    %p87 = scmp.ne.s32.totalorder %s82, %s84
    %p88 = scmp.eq.s32.totalorder %s27, 0
    %p89 = por %p87, %p88
    %p90 = scmp.ne.s32.totalorder %s82, %s84
    %p91 = scmp.eq.s32.totalorder %s32, 1
    %p92 = por %p90, %p91
    %p93 = scmp.ne.s32.totalorder %s84, %s85
    %p94 = scmp.eq.s32.totalorder %s32, 0
    %p95 = por %p93, %p94
    %p96 = scmp.ne.s32.totalorder %s84, %s85
    %p97 = scmp.eq.s32.totalorder %s33, 1
    %p98 = por %p96, %p97
    %p100 = scmp.ne.s32.totalorder %s85, %s99
    %p101 = scmp.eq.s32.totalorder %s33, 0
    %p102 = por %p100, %p101
    %s104 = sadd.s32 %s103, 1
    %p107 = scmp.eq.s32.totalorder %s27, 1
    %p108 = scmp.ne.s32.totalorder %s103, %s105
    %p109 = scmp.eq.s32.totalorder %s27, 0
    %p110 = por %p108, %p109
    %p111 = scmp.ne.s32.totalorder %s103, %s105
    %p112 = scmp.eq.s32.totalorder %s32, 1
    %p113 = por %p111, %p112
    %p114 = scmp.ne.s32.totalorder %s105, %s106
    %p115 = scmp.eq.s32.totalorder %s32, 0
    %p116 = por %p114, %p115
    %p117 = scmp.ne.s32.totalorder %s105, %s106
    %p118 = scmp.eq.s32.totalorder %s33, 1
    %p119 = por %p117, %p118
    %p121 = scmp.ne.s32.totalorder %s106, %s120
    %p122 = scmp.eq.s32.totalorder %s33, 0
    %p123 = por %p121, %p122
    %s125 = sadd.s32 %s124, 1
    %p128 = scmp.eq.s32.totalorder %s27, 1
    %p129 = scmp.ne.s32.totalorder %s124, %s126
    %p130 = scmp.eq.s32.totalorder %s27, 0
    %p131 = por %p129, %p130
    %p132 = scmp.ne.s32.totalorder %s124, %s126
    %p133 = scmp.eq.s32.totalorder %s32, 1
    %p134 = por %p132, %p133
    %p135 = scmp.ne.s32.totalorder %s126, %s127
    %p136 = scmp.eq.s32.totalorder %s32, 0
    %p137 = por %p135, %p136
    %p138 = scmp.ne.s32.totalorder %s126, %s127
    %p139 = scmp.eq.s32.totalorder %s33, 1
    %p140 = por %p138, %p139
    %p142 = scmp.ne.s32.totalorder %s127, %s141
    %p143 = scmp.eq.s32.totalorder %s33, 0
    %p144 = por %p142, %p143
    %s146 = sadd.s32 %s145, 1
    %p149 = scmp.eq.s32.totalorder %s27, 1
    %p150 = scmp.ne.s32.totalorder %s145, %s147
    %p151 = scmp.eq.s32.totalorder %s27, 0
    %p152 = por %p150, %p151
    %p153 = scmp.ne.s32.totalorder %s145, %s147
    %p154 = scmp.eq.s32.totalorder %s32, 1
    %p155 = por %p153, %p154
    %p156 = scmp.ne.s32.totalorder %s147, %s148
    %p157 = scmp.eq.s32.totalorder %s32, 0
    %p158 = por %p156, %p157
    %p159 = scmp.ne.s32.totalorder %s147, %s148
    %p160 = scmp.eq.s32.totalorder %s33, 1
    %p161 = por %p159, %p160
    %p163 = scmp.ne.s32.totalorder %s148, %s162
    %p164 = scmp.eq.s32.totalorder %s33, 0
    %p165 = por %p163, %p164
    %s167 = sadd.s32 %s166, 1
    %p170 = scmp.eq.s32.totalorder %s27, 1
    %p171 = scmp.ne.s32.totalorder %s166, %s168
    %p172 = scmp.eq.s32.totalorder %s27, 0
    %p173 = por %p171, %p172
    %p174 = scmp.ne.s32.totalorder %s166, %s168
    %p175 = scmp.eq.s32.totalorder %s32, 1
    %p176 = por %p174, %p175
    %p177 = scmp.ne.s32.totalorder %s168, %s169
    %p178 = scmp.eq.s32.totalorder %s32, 0
    %p179 = por %p177, %p178
    %p180 = scmp.ne.s32.totalorder %s168, %s169
    %p181 = scmp.eq.s32.totalorder %s33, 1
    %p182 = por %p180, %p181
    %p184 = scmp.ne.s32.totalorder %s169, %s183
    %p185 = scmp.eq.s32.totalorder %s33, 0
    %p186 = por %p184, %p185
    %s188 = sadd.s32 %s187, 1
    %p191 = scmp.eq.s32.totalorder %s27, 1
    %p192 = scmp.ne.s32.totalorder %s187, %s189
    %p193 = scmp.eq.s32.totalorder %s27, 0
    %p194 = por %p192, %p193
    %p195 = scmp.ne.s32.totalorder %s187, %s189
    %p196 = scmp.eq.s32.totalorder %s32, 1
    %p197 = por %p195, %p196
    %p198 = scmp.ne.s32.totalorder %s189, %s190
    %p199 = scmp.eq.s32.totalorder %s32, 0
    %p200 = por %p198, %p199
    %p201 = scmp.ne.s32.totalorder %s189, %s190
    %p202 = scmp.eq.s32.totalorder %s33, 1
    %p203 = por %p201, %p202
    %p205 = scmp.ne.s32.totalorder %s190, %s204
    %p206 = scmp.eq.s32.totalorder %s33, 0
    %p207 = por %p205, %p206
    %s209 = sadd.s32 %s208, 1
    %p212 = scmp.eq.s32.totalorder %s27, 1
    %p213 = scmp.ne.s32.totalorder %s208, %s210
    %p214 = scmp.eq.s32.totalorder %s27, 0
    %p215 = por %p213, %p214
    %p216 = scmp.ne.s32.totalorder %s208, %s210
    %p217 = scmp.eq.s32.totalorder %s32, 1
    %p218 = por %p216, %p217
    %p219 = scmp.ne.s32.totalorder %s210, %s211
    %p220 = scmp.eq.s32.totalorder %s32, 0
    %p221 = por %p219, %p220
    %p222 = scmp.ne.s32.totalorder %s210, %s211
    %p223 = scmp.eq.s32.totalorder %s33, 1
    %p224 = por %p222, %p223
    %p226 = scmp.ne.s32.totalorder %s211, %s225
    %p227 = scmp.eq.s32.totalorder %s33, 0
    %p228 = por %p226, %p227
    %s230 = sadd.s32 %s229, 1
    %p233 = scmp.eq.s32.totalorder %s27, 1
    %p234 = scmp.ne.s32.totalorder %s229, %s231
    %p235 = scmp.eq.s32.totalorder %s27, 0
    %p236 = por %p234, %p235
    %p237 = scmp.ne.s32.totalorder %s229, %s231
    %p238 = scmp.eq.s32.totalorder %s32, 1
    %p239 = por %p237, %p238
    %p240 = scmp.ne.s32.totalorder %s231, %s232
    %p241 = scmp.eq.s32.totalorder %s32, 0
    %p242 = por %p240, %p241
    %p243 = scmp.ne.s32.totalorder %s231, %s232
    %p244 = scmp.eq.s32.totalorder %s33, 1
    %p245 = por %p243, %p244
    %p247 = scmp.ne.s32.totalorder %s232, %s246
    %p248 = scmp.eq.s32.totalorder %s33, 0
    %p249 = por %p247, %p248
    %s251 = sadd.s32 %s250, 1
    %p254 = scmp.eq.s32.totalorder %s27, 1
    %p255 = scmp.ne.s32.totalorder %s250, %s252
    %p256 = scmp.eq.s32.totalorder %s27, 0
    %p257 = por %p255, %p256
    %p258 = scmp.ne.s32.totalorder %s250, %s252
    %p259 = scmp.eq.s32.totalorder %s32, 1
    %p260 = por %p258, %p259
    %p261 = scmp.ne.s32.totalorder %s252, %s253
    %p262 = scmp.eq.s32.totalorder %s32, 0
    %p263 = por %p261, %p262
    %p264 = scmp.ne.s32.totalorder %s252, %s253
    %p265 = scmp.eq.s32.totalorder %s33, 1
    %p266 = por %p264, %p265
    %p268 = scmp.ne.s32.totalorder %s253, %s267
    %p269 = scmp.eq.s32.totalorder %s33, 0
    %p270 = por %p268, %p269
    %s272 = sadd.s32 %s271, 1
    %p275 = scmp.eq.s32.totalorder %s27, 1
    %p276 = scmp.ne.s32.totalorder %s271, %s273
    %p277 = scmp.eq.s32.totalorder %s27, 0
    %p278 = por %p276, %p277
    %p279 = scmp.ne.s32.totalorder %s271, %s273
    %p280 = scmp.eq.s32.totalorder %s32, 1
    %p281 = por %p279, %p280
    %p282 = scmp.ne.s32.totalorder %s273, %s274
    %p283 = scmp.eq.s32.totalorder %s32, 0
    %p284 = por %p282, %p283
    %p285 = scmp.ne.s32.totalorder %s273, %s274
    %p286 = scmp.eq.s32.totalorder %s33, 1
    %p287 = por %p285, %p286
    %p289 = scmp.ne.s32.totalorder %s274, %s288
    %p290 = scmp.eq.s32.totalorder %s33, 0
    %p291 = por %p289, %p290
    %s293 = sadd.s32 %s292, 1
    %p296 = scmp.eq.s32.totalorder %s27, 1
    %p297 = scmp.ne.s32.totalorder %s292, %s294
    %p298 = scmp.eq.s32.totalorder %s27, 0
    %p299 = por %p297, %p298
    %p300 = scmp.ne.s32.totalorder %s292, %s294
    %p301 = scmp.eq.s32.totalorder %s32, 1
    %p302 = por %p300, %p301
    %p303 = scmp.ne.s32.totalorder %s294, %s295
    %p304 = scmp.eq.s32.totalorder %s32, 0
    %p305 = por %p303, %p304
    %p306 = scmp.ne.s32.totalorder %s294, %s295
    %p307 = scmp.eq.s32.totalorder %s33, 1
    %p308 = por %p306, %p307
    %p310 = scmp.ne.s32.totalorder %s295, %s309
    %p311 = scmp.eq.s32.totalorder %s33, 0
    %p312 = por %p310, %p311
    %s314 = sadd.s32 %s313, 1
    %p317 = scmp.eq.s32.totalorder %s27, 1
    %p318 = scmp.ne.s32.totalorder %s313, %s315
    %p319 = scmp.eq.s32.totalorder %s27, 0
    %p320 = por %p318, %p319
    %p321 = scmp.ne.s32.totalorder %s313, %s315
    %p322 = scmp.eq.s32.totalorder %s32, 1
    %p323 = por %p321, %p322
    %p324 = scmp.ne.s32.totalorder %s315, %s316
    %p325 = scmp.eq.s32.totalorder %s32, 0
    %p326 = por %p324, %p325
    %p327 = scmp.ne.s32.totalorder %s315, %s316
    %p328 = scmp.eq.s32.totalorder %s33, 1
    %p329 = por %p327, %p328
    %p331 = scmp.ne.s32.totalorder %s316, %s330
    %p332 = scmp.eq.s32.totalorder %s33, 0
    %p333 = por %p331, %p332
    %s335 = sadd.s32 %s334, 1
    %p338 = scmp.eq.s32.totalorder %s27, 1
    %p339 = scmp.ne.s32.totalorder %s334, %s336
    %p340 = scmp.eq.s32.totalorder %s27, 0
    %p341 = por %p339, %p340
    %p342 = scmp.ne.s32.totalorder %s334, %s336
    %p343 = scmp.eq.s32.totalorder %s32, 1
    %p344 = por %p342, %p343
    %p345 = scmp.ne.s32.totalorder %s336, %s337
    %p346 = scmp.eq.s32.totalorder %s32, 0
    %p347 = por %p345, %p346
    %p348 = scmp.ne.s32.totalorder %s336, %s337
    %p349 = scmp.eq.s32.totalorder %s33, 1
    %p350 = por %p348, %p349
    %p352 = scmp.ne.s32.totalorder %s337, %s351
    %p353 = scmp.eq.s32.totalorder %s33, 0
    %p354 = por %p352, %p353
    %s356 = sadd.s32 %s355, 1
    %p359 = scmp.eq.s32.totalorder %s27, 1
    %p360 = scmp.ne.s32.totalorder %s355, %s357
    %p361 = scmp.eq.s32.totalorder %s27, 0
    %p362 = por %p360, %p361
    %p363 = scmp.ne.s32.totalorder %s355, %s357
    %p364 = scmp.eq.s32.totalorder %s32, 1
    %p365 = por %p363, %p364
    %p366 = scmp.ne.s32.totalorder %s357, %s358
    %p367 = scmp.eq.s32.totalorder %s32, 0
    %p368 = por %p366, %p367
    %p369 = scmp.ne.s32.totalorder %s357, %s358
    %p370 = scmp.eq.s32.totalorder %s33, 1
    %p371 = por %p369, %p370
    %p373 = scmp.ne.s32.totalorder %s358, %s372
    %p374 = scmp.eq.s32.totalorder %s33, 0
    %p375 = por %p373, %p374
    %s377 = sadd.s32 %s376, 1
    %p380 = scmp.eq.s32.totalorder %s27, 1
    %p381 = scmp.ne.s32.totalorder %s376, %s378
    %p382 = scmp.eq.s32.totalorder %s27, 0
    %p383 = por %p381, %p382
    %p384 = scmp.ne.s32.totalorder %s376, %s378
    %p385 = scmp.eq.s32.totalorder %s32, 1
    %p386 = por %p384, %p385
    %p387 = scmp.ne.s32.totalorder %s378, %s379
    %p388 = scmp.eq.s32.totalorder %s32, 0
    %p389 = por %p387, %p388
    %p390 = scmp.ne.s32.totalorder %s378, %s379
    %p391 = scmp.eq.s32.totalorder %s33, 1
    %p392 = por %p390, %p391
    %p394 = scmp.ne.s32.totalorder %s379, %s393
    %p395 = scmp.eq.s32.totalorder %s33, 0
    %p396 = por %p394, %p395
    %s398 = sadd.s32 %s397, 1
    %p401 = scmp.eq.s32.totalorder %s27, 1
    %p402 = scmp.ne.s32.totalorder %s397, %s399
    %p403 = scmp.eq.s32.totalorder %s27, 0
    %p404 = por %p402, %p403
    %p405 = scmp.ne.s32.totalorder %s397, %s399
    %p406 = scmp.eq.s32.totalorder %s32, 1
    %p407 = por %p405, %p406
    %p408 = scmp.ne.s32.totalorder %s399, %s400
    %p409 = scmp.eq.s32.totalorder %s32, 0
    %p410 = por %p408, %p409
    %p411 = scmp.ne.s32.totalorder %s399, %s400
    %p412 = scmp.eq.s32.totalorder %s33, 1
    %p413 = por %p411, %p412
    %p415 = scmp.ne.s32.totalorder %s400, %s414
    %p416 = scmp.eq.s32.totalorder %s33, 0
    %p417 = por %p415, %p416
    %s419 = sadd.s32 %s418, 1
    %p422 = scmp.eq.s32.totalorder %s27, 1
    %p423 = scmp.ne.s32.totalorder %s418, %s420
    %p424 = scmp.eq.s32.totalorder %s27, 0
    %p425 = por %p423, %p424
    %p426 = scmp.ne.s32.totalorder %s418, %s420
    %p427 = scmp.eq.s32.totalorder %s32, 1
    %p428 = por %p426, %p427
    %p429 = scmp.ne.s32.totalorder %s420, %s421
    %p430 = scmp.eq.s32.totalorder %s32, 0
    %p431 = por %p429, %p430
    %p432 = scmp.ne.s32.totalorder %s420, %s421
    %p433 = scmp.eq.s32.totalorder %s33, 1
    %p434 = por %p432, %p433
    %p436 = scmp.ne.s32.totalorder %s421, %s435
    %p437 = scmp.eq.s32.totalorder %s33, 0
    %p438 = por %p436, %p437
    %s439 = ssub.s32 %s27, %s34
    %p440 = scmp.eq.s32.totalorder %s439, 0
    %s442 = sadd.s32 %s441, 1
    %s443 = scalar_select %p440, %s441, %s442
    %p446 = pneg %p440
    %p447 = scmp.eq.s32.totalorder %s27, 1
    %p448 = por %p446, %p447
    %p449 = scmp.ne.s32.totalorder %s441, %s444
    %p450 = scmp.eq.s32.totalorder %s27, 0
    %p451 = por %p449, %p450
    %p452 = scmp.ne.s32.totalorder %s441, %s444
    %p453 = scmp.eq.s32.totalorder %s32, 1
    %p454 = por %p452, %p453
    %p455 = scmp.ne.s32.totalorder %s444, %s445
    %p456 = scmp.eq.s32.totalorder %s32, 0
    %p457 = por %p455, %p456
    %p458 = scmp.ne.s32.totalorder %s444, %s445
    %p459 = scmp.eq.s32.totalorder %s33, 1
    %p460 = por %p458, %p459
    %p462 = scmp.ne.s32.totalorder %s445, %s461
    %p463 = scmp.eq.s32.totalorder %s33, 0
    %p464 = por %p462, %p463
    %s465 = ssub.s32 %s27, %s34
    %p466 = scmp.eq.s32.totalorder %s465, 0
    %s468 = sadd.s32 %s467, 1
    %s469 = scalar_select %p466, %s467, %s468
    %p472 = pneg %p466
    %p473 = scmp.eq.s32.totalorder %s27, 1
    %p474 = por %p472, %p473
    %p475 = scmp.ne.s32.totalorder %s467, %s470
    %p476 = scmp.eq.s32.totalorder %s27, 0
    %p477 = por %p475, %p476
    %p478 = scmp.ne.s32.totalorder %s467, %s470
    %p479 = scmp.eq.s32.totalorder %s32, 1
    %p480 = por %p478, %p479
    %p481 = scmp.ne.s32.totalorder %s470, %s471
    %p482 = scmp.eq.s32.totalorder %s32, 0
    %p483 = por %p481, %p482
    %p484 = scmp.ne.s32.totalorder %s470, %s471
    %p485 = scmp.eq.s32.totalorder %s33, 1
    %p486 = por %p484, %p485
    %p488 = scmp.ne.s32.totalorder %s471, %s487
    %p489 = scmp.eq.s32.totalorder %s33, 0
    %p490 = por %p488, %p489
    %p491 = scmp.le.s32.totalorder 1, %s27
    %p492 = scmp.lt.s32.totalorder %s27, 3
    %p493 = pnand %p491, %p492
    %p494 = pneg %p493
    // Predicated region
    $region9: #{hupr_forward.1} parent=5 // pred_check
      _
    $region10: #{hupr_forward.1} parent=5 // pred_check_branch
      %496 = sbr.rel (%p493) target = $region12
    $region11: #{hupr_forward.1} parent=5 // pred_region
      %s497 = ssub.s32 %s27, 1
      // Predicated region
      $region13: #{hupr_forward.1} parent=11 // pred_check
        %p498 = pneg %p74
      $region14: #{hupr_forward.1} parent=11 // pred_check_branch
        %500 = sbr.rel (%p498) target = $region16
      $region15: #{hupr_forward.1} parent=11 // pred_region
        _
      $region16: #{hupr_forward.1} parent=11 // pred_fallthru
        _
      // Predicated region
      $region17: #{hupr_forward.1} parent=11 // pred_check
        %p501 = pneg %p95
      $region18: #{hupr_forward.1} parent=11 // pred_check_branch
        %503 = sbr.rel (%p501) target = $region20
      $region19: #{hupr_forward.1} parent=11 // pred_region
        _
      $region20: #{hupr_forward.1} parent=11 // pred_fallthru
        _
      // Predicated region
      $region21: #{hupr_forward.1} parent=11 // pred_check
        %p504 = pneg %p116
      $region22: #{hupr_forward.1} parent=11 // pred_check_branch
        %506 = sbr.rel (%p504) target = $region24
      $region23: #{hupr_forward.1} parent=11 // pred_region
        _
      $region24: #{hupr_forward.1} parent=11 // pred_fallthru
        _
      // Predicated region
      $region25: #{hupr_forward.1} parent=11 // pred_check
        %p507 = pneg %p137
      $region26: #{hupr_forward.1} parent=11 // pred_check_branch
        %509 = sbr.rel (%p507) target = $region28
      $region27: #{hupr_forward.1} parent=11 // pred_region
        _
      $region28: #{hupr_forward.1} parent=11 // pred_fallthru
        _
      // Predicated region
      $region29: #{hupr_forward.1} parent=11 // pred_check
        %p510 = pneg %p158
      $region30: #{hupr_forward.1} parent=11 // pred_check_branch
        %512 = sbr.rel (%p510) target = $region32
      $region31: #{hupr_forward.1} parent=11 // pred_region
        _
      $region32: #{hupr_forward.1} parent=11 // pred_fallthru
        _
      // Predicated region
      $region33: #{hupr_forward.1} parent=11 // pred_check
        %p513 = pneg %p179
      $region34: #{hupr_forward.1} parent=11 // pred_check_branch
        %515 = sbr.rel (%p513) target = $region36
      $region35: #{hupr_forward.1} parent=11 // pred_region
        _
      $region36: #{hupr_forward.1} parent=11 // pred_fallthru
        _
      // Predicated region
      $region37: #{hupr_forward.1} parent=11 // pred_check
        %p516 = pneg %p200
      $region38: #{hupr_forward.1} parent=11 // pred_check_branch
        %518 = sbr.rel (%p516) target = $region40
      $region39: #{hupr_forward.1} parent=11 // pred_region
        _
      $region40: #{hupr_forward.1} parent=11 // pred_fallthru
        _
      // Predicated region
      $region41: #{hupr_forward.1} parent=11 // pred_check
        %p519 = pneg %p221
      $region42: #{hupr_forward.1} parent=11 // pred_check_branch
        %521 = sbr.rel (%p519) target = $region44
      $region43: #{hupr_forward.1} parent=11 // pred_region
        _
      $region44: #{hupr_forward.1} parent=11 // pred_fallthru
        _
      // Predicated region
      $region45: #{hupr_forward.1} parent=11 // pred_check
        %p522 = pneg %p242
      $region46: #{hupr_forward.1} parent=11 // pred_check_branch
        %524 = sbr.rel (%p522) target = $region48
      $region47: #{hupr_forward.1} parent=11 // pred_region
        _
      $region48: #{hupr_forward.1} parent=11 // pred_fallthru
        _
      // Predicated region
      $region49: #{hupr_forward.1} parent=11 // pred_check
        %p525 = pneg %p263
      $region50: #{hupr_forward.1} parent=11 // pred_check_branch
        %527 = sbr.rel (%p525) target = $region52
      $region51: #{hupr_forward.1} parent=11 // pred_region
        _
      $region52: #{hupr_forward.1} parent=11 // pred_fallthru
        _
      // Predicated region
      $region53: #{hupr_forward.1} parent=11 // pred_check
        %p528 = pneg %p284
      $region54: #{hupr_forward.1} parent=11 // pred_check_branch
        %530 = sbr.rel (%p528) target = $region56
      $region55: #{hupr_forward.1} parent=11 // pred_region
        _
      $region56: #{hupr_forward.1} parent=11 // pred_fallthru
        _
      // Predicated region
      $region57: #{hupr_forward.1} parent=11 // pred_check
        %p531 = pneg %p305
      $region58: #{hupr_forward.1} parent=11 // pred_check_branch
        %533 = sbr.rel (%p531) target = $region60
      $region59: #{hupr_forward.1} parent=11 // pred_region
        _
      $region60: #{hupr_forward.1} parent=11 // pred_fallthru
        _
      // Predicated region
      $region61: #{hupr_forward.1} parent=11 // pred_check
        %p534 = pneg %p326
      $region62: #{hupr_forward.1} parent=11 // pred_check_branch
        %536 = sbr.rel (%p534) target = $region64
      $region63: #{hupr_forward.1} parent=11 // pred_region
        _
      $region64: #{hupr_forward.1} parent=11 // pred_fallthru
        _
      // Predicated region
      $region65: #{hupr_forward.1} parent=11 // pred_check
        %p537 = pneg %p347
      $region66: #{hupr_forward.1} parent=11 // pred_check_branch
        %539 = sbr.rel (%p537) target = $region68
      $region67: #{hupr_forward.1} parent=11 // pred_region
        _
      $region68: #{hupr_forward.1} parent=11 // pred_fallthru
        _
      // Predicated region
      $region69: #{hupr_forward.1} parent=11 // pred_check
        %p540 = pneg %p368
      $region70: #{hupr_forward.1} parent=11 // pred_check_branch
        %542 = sbr.rel (%p540) target = $region72
      $region71: #{hupr_forward.1} parent=11 // pred_region
        _
      $region72: #{hupr_forward.1} parent=11 // pred_fallthru
        _
      // Predicated region
      $region73: #{hupr_forward.1} parent=11 // pred_check
        %p543 = pneg %p389
      $region74: #{hupr_forward.1} parent=11 // pred_check_branch
        %545 = sbr.rel (%p543) target = $region76
      $region75: #{hupr_forward.1} parent=11 // pred_region
        _
      $region76: #{hupr_forward.1} parent=11 // pred_fallthru
        _
      // Predicated region
      $region77: #{hupr_forward.1} parent=11 // pred_check
        %p546 = pneg %p410
      $region78: #{hupr_forward.1} parent=11 // pred_check_branch
        %548 = sbr.rel (%p546) target = $region80
      $region79: #{hupr_forward.1} parent=11 // pred_region
        _
      $region80: #{hupr_forward.1} parent=11 // pred_fallthru
        _
      // Predicated region
      $region81: #{hupr_forward.1} parent=11 // pred_check
        %p549 = pneg %p431
      $region82: #{hupr_forward.1} parent=11 // pred_check_branch
        %551 = sbr.rel (%p549) target = $region84
      $region83: #{hupr_forward.1} parent=11 // pred_region
        _
      $region84: #{hupr_forward.1} parent=11 // pred_fallthru
        _
    $region12: #{hupr_forward.1} parent=5 // pred_fallthru
      _
    %p552 = scmp.lt.s32.totalorder %s27, 2
    // Predicated region
    $region85: #{hupr_forward.1} parent=5 // pred_check
      %p553 = pneg %p552
    $region86: #{hupr_forward.1} parent=5 // pred_check_branch
      %555 = sbr.rel (%p553) target = $region88
    $region87: #{hupr_forward.1} parent=5 // pred_region
      // Predicated region
      $region89: #{hupr_forward.1} parent=87 // pred_check
        %p556 = pneg %p47
      $region90: #{hupr_forward.1} parent=87 // pred_check_branch
        %558 = sbr.rel (%p556) target = $region92
      $region91: #{hupr_forward.1} parent=87 // pred_region
        %p559 = scmp.lt.s32.totalorder %s27, 1
        %s560 = scalar_select %p559, %s27, 1
        %s561 = smul.addr %s560, 64
        %s562 = smul.addr %s561, 4
        %s563 = scalar_lea.vmem %s0, %s562
      $region92: #{hupr_forward.1} parent=87 // pred_fallthru
        _
    $region88: #{hupr_forward.1} parent=5 // pred_fallthru
      _
    %p564 = scmp.le.s32.totalorder 1, %s27
    %p565 = scmp.lt.s32.totalorder %s27, 3
    %p566 = pnand %p564, %p565
    %p567 = pneg %p566
    // Predicated region
    $region93: #{hupr_forward.1} parent=5 // pred_check
      _
    $region94: #{hupr_forward.1} parent=5 // pred_check_branch
      %569 = sbr.rel (%p566) target = $region96
    $region95: #{hupr_forward.1} parent=5 // pred_region
      %s570 = ssub.s32 %s27, 1
      %p571 = scmp.lt.s32.totalorder %s32, 1
      %s572 = scalar_select %p571, %s32, 1
      %s573 = smul.addr %s572, 64
      %s574 = smul.addr %s573, 4
      %s575 = scalar_lea.vmem %s0, %s574
      %p576 = pneg %p53
      %p577 = pneg %p50
      %p578 = pneg %p74
      %p579 = pneg %p71
      %p580 = pneg %p95
      %p581 = pneg %p92
      %p582 = pneg %p116
      %p583 = pneg %p113
      %p584 = pneg %p137
      %p585 = pneg %p134
      %p586 = pneg %p158
      %p587 = pneg %p155
      %p588 = pneg %p179
      %p589 = pneg %p176
      %p590 = pneg %p200
      %p591 = pneg %p197
      %p592 = pneg %p221
      %p593 = pneg %p218
      %p594 = pneg %p242
      %p595 = pneg %p239
      %p596 = pneg %p263
      %p597 = pneg %p260
      %p598 = pneg %p284
      %p599 = pneg %p281
      %p600 = pneg %p305
      %p601 = pneg %p302
      %p602 = pneg %p326
      %p603 = pneg %p323
      %p604 = pneg %p347
      %p605 = pneg %p344
      %p606 = pneg %p368
      %p607 = pneg %p365
      %p608 = pneg %p389
      %p609 = pneg %p386
      %p610 = pneg %p410
      %p611 = pneg %p407
      %p612 = pneg %p431
      %p613 = pneg %p428
      %p614 = pneg %p457
      %p615 = pneg %p454
      %p616 = scmp.lt.s32.totalorder %s32, 1
      %s617 = scalar_select %p616, %s32, 1
      %s618 = smul.addr %s617, 2
      %s619 = smul.addr %s618, 8
      %s620 = scalar_lea.vmem %s19, %s619
      %p621 = pneg %p483
      %p622 = pneg %p480
      %p623 = scmp.lt.s32.totalorder %s32, 1
      %s624 = scalar_select %p623, %s32, 1
      %s625 = smul.addr %s624, 2
      %s626 = smul.addr %s625, 8
      %s627 = scalar_lea.vmem %s20, %s626
      %p628 = scmp.lt.s32.totalorder %s32, 1
      %s629 = scalar_select %p628, %s32, 1
      %s630 = smul.addr %s629, 64
      %s631 = smul.addr %s630, 4
      %s632 = scalar_lea.vmem %s0, %s631
      %p633 = scmp.lt.s32.totalorder %s32, 1
      %s634 = scalar_select %p633, %s32, 1
      %s635 = smul.addr %s634, 2
      %s636 = smul.addr %s635, 8
      %s637 = scalar_lea.vmem %s19, %s636
      %p638 = scmp.lt.s32.totalorder %s32, 1
      %s639 = scalar_select %p638, %s32, 1
      %s640 = smul.addr %s639, 2
      %s641 = smul.addr %s640, 8
      %s642 = scalar_lea.vmem %s20, %s641
      %v644 = vld [vmem:[%s1] sm:$0xff]
      %v645 = vld [vmem:[%s1 + $0x8] sm:$0xff]
      %v646 = vld [vmem:[%s1 + $0x10] sm:$0xff]
      %v647 = vld [vmem:[%s1 + $0x18] sm:$0xff]
      %v648 = vld [vmem:[%s1 + $0x20] sm:$0xff]
      %v649 = vld [vmem:[%s1 + $0x28] sm:$0xff]
      %v650 = vld [vmem:[%s1 + $0x30] sm:$0xff]
      %v651 = vld [vmem:[%s1 + $0x38] sm:$0xff]
      %v652 = vld [vmem:[%s632] sm:$0xff]
      %v653 = vld [vmem:[%s632 + $0x8] sm:$0xff]
      %v654 = vld [vmem:[%s632 + $0x10] sm:$0xff]
      %v655 = vld [vmem:[%s632 + $0x18] sm:$0xff]
      %v656 = vld [vmem:[%s632 + $0x20] sm:$0xff]
      %v657 = vld [vmem:[%s632 + $0x28] sm:$0xff]
      %v658 = vld [vmem:[%s632 + $0x30] sm:$0xff]
      %v659 = vld [vmem:[%s632 + $0x38] sm:$0xff]
      %v660 = vld [vmem:[%s632 + $0x40] sm:$0xff]
      %v661 = vld [vmem:[%s632 + $0x48] sm:$0xff]
      %v662 = vld [vmem:[%s632 + $0x50] sm:$0xff]
      %v663 = vld [vmem:[%s632 + $0x58] sm:$0xff]
      %v664 = vld [vmem:[%s632 + $0x60] sm:$0xff]
      %v665 = vld [vmem:[%s632 + $0x68] sm:$0xff]
      %v666 = vld [vmem:[%s632 + $0x70] sm:$0xff]
      %v667 = vld [vmem:[%s632 + $0x78] sm:$0xff]
      %v668 = vld [vmem:[%s632 + $0x80] sm:$0xff]
      %v669 = vld [vmem:[%s632 + $0x88] sm:$0xff]
      %v670 = vld [vmem:[%s632 + $0x90] sm:$0xff]
      %v671 = vld [vmem:[%s632 + $0x98] sm:$0xff]
      %v672 = vld [vmem:[%s632 + $0xa0] sm:$0xff]
      %v673 = vld [vmem:[%s632 + $0xa8] sm:$0xff]
      %v674 = vld [vmem:[%s632 + $0xb0] sm:$0xff]
      %v675 = vld [vmem:[%s632 + $0xb8] sm:$0xff]
      %v676 = vld [vmem:[%s632 + $0xc0] sm:$0xff]
      %v677 = vld [vmem:[%s632 + $0xc8] sm:$0xff]
      %v678 = vld [vmem:[%s632 + $0xd0] sm:$0xff]
      %v679 = vld [vmem:[%s632 + $0xd8] sm:$0xff]
      %v680 = vld [vmem:[%s632 + $0xe0] sm:$0xff]
      %v681 = vld [vmem:[%s632 + $0xe8] sm:$0xff]
      %v682 = vld [vmem:[%s632 + $0xf0] sm:$0xff]
      %v683 = vld [vmem:[%s632 + $0xf8] sm:$0xff]
      %v684 = vld [vmem:[%s2] sm:$0xff]
      %v685 = vld [vmem:[%s2 + $0x8] sm:$0xff]
      %v686 = vld [vmem:[%s2 + $0x10] sm:$0xff]
      %v687 = vld [vmem:[%s2 + $0x18] sm:$0xff]
      %v688 = vld [vmem:[%s2 + $0x20] sm:$0xff]
      %v689 = vld [vmem:[%s2 + $0x28] sm:$0xff]
      %v690 = vld [vmem:[%s2 + $0x30] sm:$0xff]
      %v691 = vld [vmem:[%s2 + $0x38] sm:$0xff]
      %693 = vset.pattern.permute.xlu0 0
      %694 = vperm.xlu0 %693, %v684
      %v695 = vpop.permute.xlu0 %694
      %698 = vset.pattern.permute.xlu0 0
      %699 = vperm.xlu0 %698, %v685
      %v700 = vpop.permute.xlu0 %699
      %703 = vset.pattern.permute.xlu0 0
      %704 = vperm.xlu0 %703, %v686
      %v705 = vpop.permute.xlu0 %704
      %708 = vset.pattern.permute.xlu0 0
      %709 = vperm.xlu0 %708, %v687
      %v710 = vpop.permute.xlu0 %709
      %713 = vset.pattern.permute.xlu0 0
      %714 = vperm.xlu0 %713, %v688
      %v715 = vpop.permute.xlu0 %714
      %718 = vset.pattern.permute.xlu0 0
      %719 = vperm.xlu0 %718, %v689
      %v720 = vpop.permute.xlu0 %719
      %723 = vset.pattern.permute.xlu0 0
      %724 = vperm.xlu0 %723, %v690
      %v725 = vpop.permute.xlu0 %724
      %728 = vset.pattern.permute.xlu0 0
      %729 = vperm.xlu0 %728, %v691
      %v730 = vpop.permute.xlu0 %729
      %v740 = vunpack.c.l.b16 %v644
      %v741 = vunpack.c.h.b16 %v644
      %v742 = vunpack.c.l.b16 %v645
      %v743 = vunpack.c.h.b16 %v645
      %v744 = vunpack.c.l.b16 %v646
      %v745 = vunpack.c.h.b16 %v646
      %v746 = vunpack.c.l.b16 %v647
      %v747 = vunpack.c.h.b16 %v647
      %v748 = vunpack.c.l.b16 %v648
      %v749 = vunpack.c.h.b16 %v648
      %v750 = vunpack.c.l.b16 %v649
      %v751 = vunpack.c.h.b16 %v649
      %v752 = vunpack.c.l.b16 %v650
      %v753 = vunpack.c.h.b16 %v650
      %v754 = vunpack.c.l.b16 %v651
      %v755 = vunpack.c.h.b16 %v651
      %v756 = vpack.c.b16 %v742, %v740
      %v757 = vpack.c.b16 %v743, %v741
      %v758 = vpack.c.b16 %v746, %v744
      %v759 = vpack.c.b16 %v747, %v745
      %v760 = vpack.c.b16 %v750, %v748
      %v761 = vpack.c.b16 %v751, %v749
      %v762 = vpack.c.b16 %v754, %v752
      %v763 = vpack.c.b16 %v755, %v753
      %v804 = vunpack.c.l.b16 %v652
      %v805 = vunpack.c.h.b16 %v652
      %v806 = vunpack.c.l.b16 %v653
      %v807 = vunpack.c.h.b16 %v653
      %v808 = vunpack.c.l.b16 %v654
      %v809 = vunpack.c.h.b16 %v654
      %v810 = vunpack.c.l.b16 %v655
      %v811 = vunpack.c.h.b16 %v655
      %v812 = vunpack.c.l.b16 %v656
      %v813 = vunpack.c.h.b16 %v656
      %v814 = vunpack.c.l.b16 %v657
      %v815 = vunpack.c.h.b16 %v657
      %v816 = vunpack.c.l.b16 %v658
      %v817 = vunpack.c.h.b16 %v658
      %v818 = vunpack.c.l.b16 %v659
      %v819 = vunpack.c.h.b16 %v659
      %v820 = vunpack.c.l.b16 %v660
      %v821 = vunpack.c.h.b16 %v660
      %v822 = vunpack.c.l.b16 %v661
      %v823 = vunpack.c.h.b16 %v661
      %v824 = vunpack.c.l.b16 %v662
      %v825 = vunpack.c.h.b16 %v662
      %v826 = vunpack.c.l.b16 %v663
      %v827 = vunpack.c.h.b16 %v663
      %v828 = vunpack.c.l.b16 %v664
      %v829 = vunpack.c.h.b16 %v664
      %v830 = vunpack.c.l.b16 %v665
      %v831 = vunpack.c.h.b16 %v665
      %v832 = vunpack.c.l.b16 %v666
      %v833 = vunpack.c.h.b16 %v666
      %v834 = vunpack.c.l.b16 %v667
      %v835 = vunpack.c.h.b16 %v667
      %v836 = vunpack.c.l.b16 %v668
      %v837 = vunpack.c.h.b16 %v668
      %v838 = vunpack.c.l.b16 %v669
      %v839 = vunpack.c.h.b16 %v669
      %v840 = vunpack.c.l.b16 %v670
      %v841 = vunpack.c.h.b16 %v670
      %v842 = vunpack.c.l.b16 %v671
      %v843 = vunpack.c.h.b16 %v671
      %v844 = vunpack.c.l.b16 %v672
      %v845 = vunpack.c.h.b16 %v672
      %v846 = vunpack.c.l.b16 %v673
      %v847 = vunpack.c.h.b16 %v673
      %v848 = vunpack.c.l.b16 %v674
      %v849 = vunpack.c.h.b16 %v674
      %v850 = vunpack.c.l.b16 %v675
      %v851 = vunpack.c.h.b16 %v675
      %v852 = vunpack.c.l.b16 %v676
      %v853 = vunpack.c.h.b16 %v676
      %v854 = vunpack.c.l.b16 %v677
      %v855 = vunpack.c.h.b16 %v677
      %v856 = vunpack.c.l.b16 %v678
      %v857 = vunpack.c.h.b16 %v678
      %v858 = vunpack.c.l.b16 %v679
      %v859 = vunpack.c.h.b16 %v679
      %v860 = vunpack.c.l.b16 %v680
      %v861 = vunpack.c.h.b16 %v680
      %v862 = vunpack.c.l.b16 %v681
      %v863 = vunpack.c.h.b16 %v681
      %v864 = vunpack.c.l.b16 %v682
      %v865 = vunpack.c.h.b16 %v682
      %v866 = vunpack.c.l.b16 %v683
      %v867 = vunpack.c.h.b16 %v683
      %v868 = vpack.c.b16 %v806, %v804
      %v869 = vpack.c.b16 %v807, %v805
      %v870 = vpack.c.b16 %v810, %v808
      %v871 = vpack.c.b16 %v811, %v809
      %v872 = vpack.c.b16 %v814, %v812
      %v873 = vpack.c.b16 %v815, %v813
      %v874 = vpack.c.b16 %v818, %v816
      %v875 = vpack.c.b16 %v819, %v817
      %v876 = vpack.c.b16 %v822, %v820
      %v877 = vpack.c.b16 %v823, %v821
      %v878 = vpack.c.b16 %v826, %v824
      %v879 = vpack.c.b16 %v827, %v825
      %v880 = vpack.c.b16 %v830, %v828
      %v881 = vpack.c.b16 %v831, %v829
      %v882 = vpack.c.b16 %v834, %v832
      %v883 = vpack.c.b16 %v835, %v833
      %v884 = vpack.c.b16 %v838, %v836
      %v885 = vpack.c.b16 %v839, %v837
      %v886 = vpack.c.b16 %v842, %v840
      %v887 = vpack.c.b16 %v843, %v841
      %v888 = vpack.c.b16 %v846, %v844
      %v889 = vpack.c.b16 %v847, %v845
      %v890 = vpack.c.b16 %v850, %v848
      %v891 = vpack.c.b16 %v851, %v849
      %v892 = vpack.c.b16 %v854, %v852
      %v893 = vpack.c.b16 %v855, %v853
      %v894 = vpack.c.b16 %v858, %v856
      %v895 = vpack.c.b16 %v859, %v857
      %v896 = vpack.c.b16 %v862, %v860
      %v897 = vpack.c.b16 %v863, %v861
      %v898 = vpack.c.b16 %v866, %v864
      %v899 = vpack.c.b16 %v867, %v865
      %932 = vmatpush.bf16.msra.mxu0 %v882
      %933 = vmatpush.bf16.msra.mxu0 %v880
      %934 = vmatpush.bf16.msra.mxu0 %v878
      %935 = vmatpush.bf16.msra.mxu0 %v876
      %936 = vmatpush.bf16.msra.mxu0 %v874
      %937 = vmatpush.bf16.msra.mxu0 %v872
      %938 = vmatpush.bf16.msra.mxu0 %v870
      %939 = vmatpush.bf16.msra.mxu0 %v868
      %940 = vmatmul.bf16.gmra.mxu0 %v756
      %v941 = vpop.f32.mrf.mxu0
      %v942 = vadd.f32 %v695, %v941
      %v943 = vpop.f32.mrf.mxu0
      %v944 = vadd.f32 %v700, %v943
      %945 = vmatmul.bf16.gmra.mxu0 %v758
      %v946 = vpop.f32.mrf.mxu0
      %v947 = vadd.f32 %v705, %v946
      %v948 = vpop.f32.mrf.mxu0
      %v949 = vadd.f32 %v710, %v948
      %950 = vmatmul.bf16.gmra.mxu0 %v760
      %v951 = vpop.f32.mrf.mxu0
      %v952 = vadd.f32 %v715, %v951
      %v953 = vpop.f32.mrf.mxu0
      %v954 = vadd.f32 %v720, %v953
      %955 = vmatmul.bf16.gmra.mxu0 %v762
      %v956 = vpop.f32.mrf.mxu0
      %v957 = vadd.f32 %v725, %v956
      %v958 = vpop.f32.mrf.mxu0
      %v959 = vadd.f32 %v730, %v958
      %960 = vdwg.mxu0
      %961 = vmatpush.bf16.msra.mxu0 %v898
      %962 = vmatpush.bf16.msra.mxu0 %v896
      %963 = vmatpush.bf16.msra.mxu0 %v894
      %964 = vmatpush.bf16.msra.mxu0 %v892
      %965 = vmatpush.bf16.msra.mxu0 %v890
      %966 = vmatpush.bf16.msra.mxu0 %v888
      %967 = vmatpush.bf16.msra.mxu0 %v886
      %968 = vmatpush.bf16.msra.mxu0 %v884
      %969 = vmatmul.bf16.gmra.mxu0 %v757
      %v970 = vpop.f32.mrf.mxu0
      %v971 = vadd.f32 %v942, %v970
      %v972 = vpop.f32.mrf.mxu0
      %v973 = vadd.f32 %v944, %v972
      %974 = vmatmul.bf16.gmra.mxu0 %v759
      %v975 = vpop.f32.mrf.mxu0
      %v976 = vadd.f32 %v947, %v975
      %v977 = vpop.f32.mrf.mxu0
      %v978 = vadd.f32 %v949, %v977
      %979 = vmatmul.bf16.gmra.mxu0 %v761
      %v980 = vpop.f32.mrf.mxu0
      %v981 = vadd.f32 %v952, %v980
      %v982 = vpop.f32.mrf.mxu0
      %v983 = vadd.f32 %v954, %v982
      %984 = vmatmul.bf16.gmra.mxu0 %v763
      %v985 = vpop.f32.mrf.mxu0
      %v986 = vadd.f32 %v957, %v985
      %v987 = vpop.f32.mrf.mxu0
      %v988 = vadd.f32 %v959, %v987
      %989 = vdwg.mxu0
      %990 = vmatpush.bf16.msra.mxu0 %v883
      %991 = vmatpush.bf16.msra.mxu0 %v881
      %992 = vmatpush.bf16.msra.mxu0 %v879
      %993 = vmatpush.bf16.msra.mxu0 %v877
      %994 = vmatpush.bf16.msra.mxu0 %v875
      %995 = vmatpush.bf16.msra.mxu0 %v873
      %996 = vmatpush.bf16.msra.mxu0 %v871
      %997 = vmatpush.bf16.msra.mxu0 %v869
      %998 = vmatmul.bf16.gmra.mxu0 %v756
      %v999 = vpop.f32.mrf.mxu0
      %v1000 = vadd.f32 %v695, %v999
      %v1001 = vpop.f32.mrf.mxu0
      %v1002 = vadd.f32 %v700, %v1001
      %1003 = vmatmul.bf16.gmra.mxu0 %v758
      %v1004 = vpop.f32.mrf.mxu0
      %v1005 = vadd.f32 %v705, %v1004
      %v1006 = vpop.f32.mrf.mxu0
      %v1007 = vadd.f32 %v710, %v1006
      %1008 = vmatmul.bf16.gmra.mxu0 %v760
      %v1009 = vpop.f32.mrf.mxu0
      %v1010 = vadd.f32 %v715, %v1009
      %v1011 = vpop.f32.mrf.mxu0
      %v1012 = vadd.f32 %v720, %v1011
      %1013 = vmatmul.bf16.gmra.mxu0 %v762
      %v1014 = vpop.f32.mrf.mxu0
      %v1015 = vadd.f32 %v725, %v1014
      %v1016 = vpop.f32.mrf.mxu0
      %v1017 = vadd.f32 %v730, %v1016
      %1018 = vdwg.mxu0
      %1019 = vmatpush.bf16.msra.mxu0 %v899
      %1020 = vmatpush.bf16.msra.mxu0 %v897
      %1021 = vmatpush.bf16.msra.mxu0 %v895
      %1022 = vmatpush.bf16.msra.mxu0 %v893
      %1023 = vmatpush.bf16.msra.mxu0 %v891
      %1024 = vmatpush.bf16.msra.mxu0 %v889
      %1025 = vmatpush.bf16.msra.mxu0 %v887
      %1026 = vmatpush.bf16.msra.mxu0 %v885
      %1027 = vmatmul.bf16.gmra.mxu0 %v757
      %v1028 = vpop.f32.mrf.mxu0
      %v1029 = vadd.f32 %v1000, %v1028
      %v1030 = vpop.f32.mrf.mxu0
      %v1031 = vadd.f32 %v1002, %v1030
      %1032 = vmatmul.bf16.gmra.mxu0 %v759
      %v1033 = vpop.f32.mrf.mxu0
      %v1034 = vadd.f32 %v1005, %v1033
      %v1035 = vpop.f32.mrf.mxu0
      %v1036 = vadd.f32 %v1007, %v1035
      %1037 = vmatmul.bf16.gmra.mxu0 %v761
      %v1038 = vpop.f32.mrf.mxu0
      %v1039 = vadd.f32 %v1010, %v1038
      %v1040 = vpop.f32.mrf.mxu0
      %v1041 = vadd.f32 %v1012, %v1040
      %1042 = vmatmul.bf16.gmra.mxu0 %v763
      %v1043 = vpop.f32.mrf.mxu0
      %v1044 = vadd.f32 %v1015, %v1043
      %v1045 = vpop.f32.mrf.mxu0
      %v1046 = vadd.f32 %v1017, %v1045
      %1047 = vdwg.mxu0
      %v1048 = vmax.f32 %v971, 0.0
      %v1049 = vmax.f32 %v1029, 0.0
      %v1050 = vmax.f32 %v973, 0.0
      %v1051 = vmax.f32 %v1031, 0.0
      %v1052 = vmax.f32 %v976, 0.0
      %v1053 = vmax.f32 %v1034, 0.0
      %v1054 = vmax.f32 %v978, 0.0
      %v1055 = vmax.f32 %v1036, 0.0
      %v1056 = vmax.f32 %v981, 0.0
      %v1057 = vmax.f32 %v1039, 0.0
      %v1058 = vmax.f32 %v983, 0.0
      %v1059 = vmax.f32 %v1041, 0.0
      %v1060 = vmax.f32 %v986, 0.0
      %v1061 = vmax.f32 %v1044, 0.0
      %v1062 = vmax.f32 %v988, 0.0
      %v1063 = vmax.f32 %v1046, 0.0
      %v1064 = vld [vmem:[%s3] sm:$0xf]
      %v1065 = vld [vmem:[%s3 + $0x4] sm:$0xf]
      %v1066 = vld [vmem:[%s3 + $0x8] sm:$0xf]
      %v1067 = vld [vmem:[%s3 + $0xc] sm:$0xf]
      %v1068 = vpack.c.bf16 %v1050, %v1048
      %v1069 = vpack.c.bf16 %v1051, %v1049
      %v1070 = vpack.c.bf16 %v1054, %v1052
      %v1071 = vpack.c.bf16 %v1055, %v1053
      %v1072 = vpack.c.bf16 %v1058, %v1056
      %v1073 = vpack.c.bf16 %v1059, %v1057
      %v1074 = vpack.c.bf16 %v1062, %v1060
      %v1075 = vpack.c.bf16 %v1063, %v1061
      %v1076 = vld [vmem:[%s4] sm:$0xff]
      %v1077 = vld [vmem:[%s4 + $0x8] sm:$0xff]
      %v1078 = vld [vmem:[%s4 + $0x10] sm:$0xff]
      %v1079 = vld [vmem:[%s4 + $0x18] sm:$0xff]
      %1081 = vset.pattern.permute.xlu0 0
      %1082 = vperm.xlu0 %1081, %v1076
      %v1083 = vpop.permute.xlu0 %1082
      %1086 = vset.pattern.permute.xlu0 0
      %1087 = vperm.xlu0 %1086, %v1077
      %v1088 = vpop.permute.xlu0 %1087
      %1091 = vset.pattern.permute.xlu0 0
      %1092 = vperm.xlu0 %1091, %v1078
      %v1093 = vpop.permute.xlu0 %1092
      %1096 = vset.pattern.permute.xlu0 0
      %1097 = vperm.xlu0 %1096, %v1079
      %v1098 = vpop.permute.xlu0 %1097
      %v1104 = vunpack.c.l.b16 %v1064
      %v1105 = vunpack.c.l.b16 %v1065
      %v1106 = vunpack.c.l.b16 %v1066
      %v1107 = vunpack.c.l.b16 %v1067
      %v1108 = vpack.c.b16 %v1105, %v1104
      %v1109 = vpack.c.b16 %v1107, %v1106
      %vm1110 = vcmask 523264
      %v1112 = vsel %vm1110, %v1108, 0
      %v1115 = vsel %vm1110, %v1109, 0
      %1117 = vmatpush.bf16.msra.mxu0 0
      %1118 = vmatpush.bf16.msra.mxu0 0
      %1119 = vmatpush.bf16.msra.mxu0 0
      %1120 = vmatpush.bf16.msra.mxu0 0
      %1121 = vmatpush.bf16.msra.mxu0 %v1074
      %1122 = vmatpush.bf16.msra.mxu0 %v1072
      %1123 = vmatpush.bf16.msra.mxu0 %v1070
      %1124 = vmatpush.bf16.msra.mxu0 %v1068
      %1125 = vmatmul.bf16.gmra.mxu0 %v1112
      %v1126 = vpop.f32.mrf.mxu0
      %v1127 = vadd.f32 %v1083, %v1126
      %v1128 = vpop.f32.mrf.mxu0
      %v1129 = vadd.f32 %v1088, %v1128
      %1130 = vmatmul.bf16.gmra.mxu0 %v1115
      %v1131 = vpop.f32.mrf.mxu0
      %v1132 = vadd.f32 %v1093, %v1131
      %v1133 = vpop.f32.mrf.mxu0
      %v1134 = vadd.f32 %v1098, %v1133
      %1135 = vdwg.mxu0
      %1136 = vmatpush.bf16.msra.mxu0 0
      %1137 = vmatpush.bf16.msra.mxu0 0
      %1138 = vmatpush.bf16.msra.mxu0 0
      %1139 = vmatpush.bf16.msra.mxu0 0
      %1140 = vmatpush.bf16.msra.mxu0 %v1075
      %1141 = vmatpush.bf16.msra.mxu0 %v1073
      %1142 = vmatpush.bf16.msra.mxu0 %v1071
      %1143 = vmatpush.bf16.msra.mxu0 %v1069
      %1144 = vmatmul.bf16.gmra.mxu0 %v1112
      %v1145 = vpop.f32.mrf.mxu0
      %v1146 = vadd.f32 %v1083, %v1145
      %v1147 = vpop.f32.mrf.mxu0
      %v1148 = vadd.f32 %v1088, %v1147
      %1149 = vmatmul.bf16.gmra.mxu0 %v1115
      %v1150 = vpop.f32.mrf.mxu0
      %v1151 = vadd.f32 %v1093, %v1150
      %v1152 = vpop.f32.mrf.mxu0
      %v1153 = vadd.f32 %v1098, %v1152
      %1154 = vdwg.mxu0
      %v1155 = vmax.f32 %v1127, 0.0
      %v1156 = vmax.f32 %v1146, 0.0
      %v1157 = vmax.f32 %v1129, 0.0
      %v1158 = vmax.f32 %v1148, 0.0
      %v1159 = vmax.f32 %v1132, 0.0
      %v1160 = vmax.f32 %v1151, 0.0
      %v1161 = vmax.f32 %v1134, 0.0
      %v1162 = vmax.f32 %v1153, 0.0
      %v1163 = vpack.c.bf16 %v1157, %v1155
      %v1164 = vpack.c.bf16 %v1158, %v1156
      %v1165 = vpack.c.bf16 %v1161, %v1159
      %v1166 = vpack.c.bf16 %v1162, %v1160
      %v1167 = vld [vmem:[%s5] sm:$0xf]
      %v1168 = vld [vmem:[%s5 + $0x4] sm:$0xf]
      %v1169 = vld [vmem:[%s5 + $0x8] sm:$0xf]
      %v1170 = vld [vmem:[%s5 + $0xc] sm:$0xf]
      %v1171 = vld [vmem:[%s5 + $0x10] sm:$0xf]
      %v1172 = vld [vmem:[%s5 + $0x14] sm:$0xf]
      %v1173 = vld [vmem:[%s5 + $0x18] sm:$0xf]
      %v1174 = vld [vmem:[%s5 + $0x1c] sm:$0xf]
      %v1175 = vld [vmem:[%s5 + $0x20] sm:$0xf]
      %v1176 = vld [vmem:[%s5 + $0x24] sm:$0xf]
      %v1177 = vld [vmem:[%s5 + $0x28] sm:$0xf]
      %v1178 = vld [vmem:[%s5 + $0x2c] sm:$0xf]
      %v1179 = vld [vmem:[%s5 + $0x30] sm:$0xf]
      %v1180 = vld [vmem:[%s5 + $0x34] sm:$0xf]
      %v1181 = vld [vmem:[%s5 + $0x38] sm:$0xf]
      %v1182 = vld [vmem:[%s5 + $0x3c] sm:$0xf]
      %v1183 = vld [vmem:[%s5 + $0x40] sm:$0xf]
      %v1184 = vld [vmem:[%s5 + $0x44] sm:$0xf]
      %v1185 = vld [vmem:[%s5 + $0x48] sm:$0xf]
      %v1186 = vld [vmem:[%s5 + $0x4c] sm:$0xf]
      %v1187 = vld [vmem:[%s5 + $0x50] sm:$0xf]
      %v1188 = vld [vmem:[%s5 + $0x54] sm:$0xf]
      %v1189 = vld [vmem:[%s5 + $0x58] sm:$0xf]
      %v1190 = vld [vmem:[%s5 + $0x5c] sm:$0xf]
      %v1191 = vld [vmem:[%s5 + $0x60] sm:$0xf]
      %v1192 = vld [vmem:[%s5 + $0x64] sm:$0xf]
      %v1193 = vld [vmem:[%s5 + $0x68] sm:$0xf]
      %v1194 = vld [vmem:[%s5 + $0x6c] sm:$0xf]
      %v1195 = vld [vmem:[%s5 + $0x70] sm:$0xf]
      %v1196 = vld [vmem:[%s5 + $0x74] sm:$0xf]
      %v1197 = vld [vmem:[%s5 + $0x78] sm:$0xf]
      %v1198 = vld [vmem:[%s5 + $0x7c] sm:$0xf]
      %v1231 = vunpack.c.l.b16 %v1167
      %v1232 = vunpack.c.l.b16 %v1168
      %v1233 = vunpack.c.l.b16 %v1169
      %v1234 = vunpack.c.l.b16 %v1170
      %v1235 = vunpack.c.l.b16 %v1171
      %v1236 = vunpack.c.l.b16 %v1172
      %v1237 = vunpack.c.l.b16 %v1173
      %v1238 = vunpack.c.l.b16 %v1174
      %v1239 = vunpack.c.l.b16 %v1175
      %v1240 = vunpack.c.l.b16 %v1176
      %v1241 = vunpack.c.l.b16 %v1177
      %v1242 = vunpack.c.l.b16 %v1178
      %v1243 = vunpack.c.l.b16 %v1179
      %v1244 = vunpack.c.l.b16 %v1180
      %v1245 = vunpack.c.l.b16 %v1181
      %v1246 = vunpack.c.l.b16 %v1182
      %v1247 = vunpack.c.l.b16 %v1183
      %v1248 = vunpack.c.l.b16 %v1184
      %v1249 = vunpack.c.l.b16 %v1185
      %v1250 = vunpack.c.l.b16 %v1186
      %v1251 = vunpack.c.l.b16 %v1187
      %v1252 = vunpack.c.l.b16 %v1188
      %v1253 = vunpack.c.l.b16 %v1189
      %v1254 = vunpack.c.l.b16 %v1190
      %v1255 = vunpack.c.l.b16 %v1191
      %v1256 = vunpack.c.l.b16 %v1192
      %v1257 = vunpack.c.l.b16 %v1193
      %v1258 = vunpack.c.l.b16 %v1194
      %v1259 = vunpack.c.l.b16 %v1195
      %v1260 = vunpack.c.l.b16 %v1196
      %v1261 = vunpack.c.l.b16 %v1197
      %v1262 = vunpack.c.l.b16 %v1198
      %v1263 = vpack.c.b16 %v1232, %v1231
      %v1264 = vpack.c.b16 %v1234, %v1233
      %v1265 = vpack.c.b16 %v1236, %v1235
      %v1266 = vpack.c.b16 %v1238, %v1237
      %v1267 = vpack.c.b16 %v1240, %v1239
      %v1268 = vpack.c.b16 %v1242, %v1241
      %v1269 = vpack.c.b16 %v1244, %v1243
      %v1270 = vpack.c.b16 %v1246, %v1245
      %v1271 = vpack.c.b16 %v1248, %v1247
      %v1272 = vpack.c.b16 %v1250, %v1249
      %v1273 = vpack.c.b16 %v1252, %v1251
      %v1274 = vpack.c.b16 %v1254, %v1253
      %v1275 = vpack.c.b16 %v1256, %v1255
      %v1276 = vpack.c.b16 %v1258, %v1257
      %v1277 = vpack.c.b16 %v1260, %v1259
      %v1278 = vpack.c.b16 %v1262, %v1261
      %1295 = vmatpush.bf16.msra.mxu0 %v1270
      %1296 = vmatpush.bf16.msra.mxu0 %v1269
      %1297 = vmatpush.bf16.msra.mxu0 %v1268
      %1298 = vmatpush.bf16.msra.mxu0 %v1267
      %1299 = vmatpush.bf16.msra.mxu0 %v1266
      %1300 = vmatpush.bf16.msra.mxu0 %v1265
      %1301 = vmatpush.bf16.msra.mxu0 %v1264
      %1302 = vmatpush.bf16.msra.mxu0 %v1263
      %1303 = vmatmul.bf16.gmra.mxu0 %v1163
      %v1304 = vpop.f32.mrf.mxu0
      %v1305 = vadd.f32 0.0, %v1304
      %v1306 = vpop.f32.mrf.mxu0
      %v1307 = vadd.f32 0.0, %v1306
      %1308 = vmatmul.bf16.gmra.mxu0 %v1165
      %v1309 = vpop.f32.mrf.mxu0
      %v1310 = vadd.f32 0.0, %v1309
      %v1311 = vpop.f32.mrf.mxu0
      %v1312 = vadd.f32 0.0, %v1311
      %1313 = vdwg.mxu0
      %1314 = vmatpush.bf16.msra.mxu0 %v1278
      %1315 = vmatpush.bf16.msra.mxu0 %v1277
      %1316 = vmatpush.bf16.msra.mxu0 %v1276
      %1317 = vmatpush.bf16.msra.mxu0 %v1275
      %1318 = vmatpush.bf16.msra.mxu0 %v1274
      %1319 = vmatpush.bf16.msra.mxu0 %v1273
      %1320 = vmatpush.bf16.msra.mxu0 %v1272
      %1321 = vmatpush.bf16.msra.mxu0 %v1271
      %1322 = vmatmul.bf16.gmra.mxu0 %v1164
      %v1323 = vpop.f32.mrf.mxu0
      %v1324 = vadd.f32 %v1305, %v1323
      %v1325 = vpop.f32.mrf.mxu0
      %v1326 = vadd.f32 %v1307, %v1325
      %1327 = vmatmul.bf16.gmra.mxu0 %v1166
      %v1328 = vpop.f32.mrf.mxu0
      %v1329 = vadd.f32 %v1310, %v1328
      %v1330 = vpop.f32.mrf.mxu0
      %v1331 = vadd.f32 %v1312, %v1330
      %1332 = vdwg.mxu0
      %v1333 = vpack.c.bf16 %v1326, %v1324
      %v1334 = vpack.c.bf16 %v1331, %v1329
      %v1335 = vld [vmem:[%s6] sm:$0xf]
      %v1336 = vld [vmem:[%s6 + $0x4] sm:$0xf]
      %v1337 = vld [vmem:[%s6 + $0x8] sm:$0xf]
      %v1338 = vld [vmem:[%s6 + $0xc] sm:$0xf]
      %v1339 = vld [vmem:[%s6 + $0x10] sm:$0xf]
      %v1340 = vld [vmem:[%s6 + $0x14] sm:$0xf]
      %v1341 = vld [vmem:[%s6 + $0x18] sm:$0xf]
      %v1342 = vld [vmem:[%s6 + $0x1c] sm:$0xf]
      %v1343 = vld [vmem:[%s7] sm:$0xff]
      %v1344 = vld [vmem:[%s7 + $0x8] sm:$0xff]
      %v1345 = vld [vmem:[%s7 + $0x10] sm:$0xff]
      %v1346 = vld [vmem:[%s7 + $0x18] sm:$0xff]
      %v1347 = vld [vmem:[%s7 + $0x20] sm:$0xff]
      %v1348 = vld [vmem:[%s7 + $0x28] sm:$0xff]
      %v1349 = vld [vmem:[%s7 + $0x30] sm:$0xff]
      %v1350 = vld [vmem:[%s7 + $0x38] sm:$0xff]
      %1352 = vset.pattern.permute.xlu0 0
      %1353 = vperm.xlu0 %1352, %v1343
      %v1354 = vpop.permute.xlu0 %1353
      %1357 = vset.pattern.permute.xlu0 0
      %1358 = vperm.xlu0 %1357, %v1344
      %v1359 = vpop.permute.xlu0 %1358
      %1362 = vset.pattern.permute.xlu0 0
      %1363 = vperm.xlu0 %1362, %v1345
      %v1364 = vpop.permute.xlu0 %1363
      %1367 = vset.pattern.permute.xlu0 0
      %1368 = vperm.xlu0 %1367, %v1346
      %v1369 = vpop.permute.xlu0 %1368
      %1372 = vset.pattern.permute.xlu0 0
      %1373 = vperm.xlu0 %1372, %v1347
      %v1374 = vpop.permute.xlu0 %1373
      %1377 = vset.pattern.permute.xlu0 0
      %1378 = vperm.xlu0 %1377, %v1348
      %v1379 = vpop.permute.xlu0 %1378
      %1382 = vset.pattern.permute.xlu0 0
      %1383 = vperm.xlu0 %1382, %v1349
      %v1384 = vpop.permute.xlu0 %1383
      %1387 = vset.pattern.permute.xlu0 0
      %1388 = vperm.xlu0 %1387, %v1350
      %v1389 = vpop.permute.xlu0 %1388
      %v1399 = vunpack.c.l.b16 %v1335
      %v1400 = vunpack.c.l.b16 %v1336
      %v1401 = vunpack.c.l.b16 %v1337
      %v1402 = vunpack.c.l.b16 %v1338
      %v1403 = vunpack.c.l.b16 %v1339
      %v1404 = vunpack.c.l.b16 %v1340
      %v1405 = vunpack.c.l.b16 %v1341
      %v1406 = vunpack.c.l.b16 %v1342
      %v1407 = vpack.c.b16 %v1400, %v1399
      %v1408 = vpack.c.b16 %v1402, %v1401
      %v1409 = vpack.c.b16 %v1404, %v1403
      %v1410 = vpack.c.b16 %v1406, %v1405
      %vm1411 = vcmask 261120
      %v1413 = vsel %vm1411, %v1407, 0
      %v1416 = vsel %vm1411, %v1408, 0
      %v1419 = vsel %vm1411, %v1409, 0
      %v1422 = vsel %vm1411, %v1410, 0
      %1424 = vmatpush.bf16.msra.mxu0 0
      %1425 = vmatpush.bf16.msra.mxu0 0
      %1426 = vmatpush.bf16.msra.mxu0 0
      %1427 = vmatpush.bf16.msra.mxu0 0
      %1428 = vmatpush.bf16.msra.mxu0 0
      %1429 = vmatpush.bf16.msra.mxu0 0
      %1430 = vmatpush.bf16.msra.mxu0 %v1334
      %1431 = vmatpush.bf16.msra.mxu0 %v1333
      %1432 = vmatmul.bf16.gmra.mxu0 %v1413
      %v1433 = vpop.f32.mrf.mxu0
      %v1434 = vadd.f32 %v1354, %v1433
      %v1435 = vpop.f32.mrf.mxu0
      %v1436 = vadd.f32 %v1359, %v1435
      %1437 = vmatmul.bf16.gmra.mxu0 %v1416
      %v1438 = vpop.f32.mrf.mxu0
      %v1439 = vadd.f32 %v1364, %v1438
      %v1440 = vpop.f32.mrf.mxu0
      %v1441 = vadd.f32 %v1369, %v1440
      %1442 = vmatmul.bf16.gmra.mxu0 %v1419
      %v1443 = vpop.f32.mrf.mxu0
      %v1444 = vadd.f32 %v1374, %v1443
      %v1445 = vpop.f32.mrf.mxu0
      %v1446 = vadd.f32 %v1379, %v1445
      %1447 = vmatmul.bf16.gmra.mxu0 %v1422
      %v1448 = vpop.f32.mrf.mxu0
      %v1449 = vadd.f32 %v1384, %v1448
      %v1450 = vpop.f32.mrf.mxu0
      %v1451 = vadd.f32 %v1389, %v1450
      %1452 = vdwg.mxu0
      %v1453 = vmax.f32 %v1434, 0.0
      %v1454 = vmax.f32 %v1436, 0.0
      %v1455 = vmax.f32 %v1439, 0.0
      %v1456 = vmax.f32 %v1441, 0.0
      %v1457 = vmax.f32 %v1444, 0.0
      %v1458 = vmax.f32 %v1446, 0.0
      %v1459 = vmax.f32 %v1449, 0.0
      %v1460 = vmax.f32 %v1451, 0.0
      %v1461 = vpack.c.bf16 %v1454, %v1453
      %v1462 = vpack.c.bf16 %v1456, %v1455
      %v1463 = vpack.c.bf16 %v1458, %v1457
      %v1464 = vpack.c.bf16 %v1460, %v1459
      %v1465 = vld [vmem:[%s8] sm:$0xf]
      %v1466 = vld [vmem:[%s8 + $0x4] sm:$0xf]
      %v1467 = vld [vmem:[%s8 + $0x8] sm:$0xf]
      %v1468 = vld [vmem:[%s8 + $0xc] sm:$0xf]
      %v1469 = vld [vmem:[%s8 + $0x10] sm:$0xf]
      %v1470 = vld [vmem:[%s8 + $0x14] sm:$0xf]
      %v1471 = vld [vmem:[%s8 + $0x18] sm:$0xf]
      %v1472 = vld [vmem:[%s8 + $0x1c] sm:$0xf]
      %v1481 = vunpack.c.l.b16 %v1465
      %v1482 = vunpack.c.l.b16 %v1466
      %v1483 = vunpack.c.l.b16 %v1467
      %v1484 = vunpack.c.l.b16 %v1468
      %v1485 = vunpack.c.l.b16 %v1469
      %v1486 = vunpack.c.l.b16 %v1470
      %v1487 = vunpack.c.l.b16 %v1471
      %v1488 = vunpack.c.l.b16 %v1472
      %v1489 = vpack.c.b16 %v1482, %v1481
      %v1490 = vpack.c.b16 %v1484, %v1483
      %v1491 = vpack.c.b16 %v1486, %v1485
      %v1492 = vpack.c.b16 %v1488, %v1487
      %v1498 = vsel %vm1110, %v1461, 0
      %v1501 = vsel %vm1110, %v1462, 0
      %v1504 = vsel %vm1110, %v1463, 0
      %v1507 = vsel %vm1110, %v1464, 0
      %1509 = vmatpush.bf16.msra.mxu0 0
      %1510 = vmatpush.bf16.msra.mxu0 0
      %1511 = vmatpush.bf16.msra.mxu0 0
      %1512 = vmatpush.bf16.msra.mxu0 0
      %1513 = vmatpush.bf16.msra.mxu0 %v1492
      %1514 = vmatpush.bf16.msra.mxu0 %v1491
      %1515 = vmatpush.bf16.msra.mxu0 %v1490
      %1516 = vmatpush.bf16.msra.mxu0 %v1489
      %1517 = vmatmul.bf16.gmra.mxu0 %v1498
      %v1518 = vpop.f32.mrf.mxu0
      %v1519 = vadd.f32 0.0, %v1518
      %v1520 = vpop.f32.mrf.mxu0
      %v1521 = vadd.f32 0.0, %v1520
      %1522 = vmatmul.bf16.gmra.mxu0 %v1501
      %v1523 = vpop.f32.mrf.mxu0
      %v1524 = vadd.f32 0.0, %v1523
      %v1525 = vpop.f32.mrf.mxu0
      %v1526 = vadd.f32 0.0, %v1525
      %1527 = vmatmul.bf16.gmra.mxu0 %v1504
      %v1528 = vpop.f32.mrf.mxu0
      %v1529 = vadd.f32 0.0, %v1528
      %v1530 = vpop.f32.mrf.mxu0
      %v1531 = vadd.f32 0.0, %v1530
      %1532 = vmatmul.bf16.gmra.mxu0 %v1507
      %v1533 = vpop.f32.mrf.mxu0
      %v1534 = vadd.f32 0.0, %v1533
      %v1535 = vpop.f32.mrf.mxu0
      %v1536 = vadd.f32 0.0, %v1535
      %1537 = vdwg.mxu0
      %v1538 = vpack.c.bf16 %v1521, %v1519
      %v1539 = vpack.c.bf16 %v1526, %v1524
      %v1540 = vpack.c.bf16 %v1531, %v1529
      %v1541 = vpack.c.bf16 %v1536, %v1534
      %v1542 = vld [vmem:[%s9] sm:$0xf]
      %v1543 = vld [vmem:[%s9 + $0x4] sm:$0xf]
      %v1544 = vld [vmem:[%s9 + $0x8] sm:$0xf]
      %v1545 = vld [vmem:[%s9 + $0xc] sm:$0xf]
      %v1546 = vld [vmem:[%s9 + $0x10] sm:$0xf]
      %v1547 = vld [vmem:[%s9 + $0x14] sm:$0xf]
      %v1548 = vld [vmem:[%s9 + $0x18] sm:$0xf]
      %v1549 = vld [vmem:[%s9 + $0x1c] sm:$0xf]
      %v1550 = vld [vmem:[%s10] sm:$0xff]
      %v1551 = vld [vmem:[%s10 + $0x8] sm:$0xff]
      %v1552 = vld [vmem:[%s10 + $0x10] sm:$0xff]
      %v1553 = vld [vmem:[%s10 + $0x18] sm:$0xff]
      %v1554 = vld [vmem:[%s10 + $0x20] sm:$0xff]
      %v1555 = vld [vmem:[%s10 + $0x28] sm:$0xff]
      %v1556 = vld [vmem:[%s10 + $0x30] sm:$0xff]
      %v1557 = vld [vmem:[%s10 + $0x38] sm:$0xff]
      %1559 = vset.pattern.permute.xlu0 0
      %1560 = vperm.xlu0 %1559, %v1550
      %v1561 = vpop.permute.xlu0 %1560
      %1564 = vset.pattern.permute.xlu0 0
      %1565 = vperm.xlu0 %1564, %v1551
      %v1566 = vpop.permute.xlu0 %1565
      %1569 = vset.pattern.permute.xlu0 0
      %1570 = vperm.xlu0 %1569, %v1552
      %v1571 = vpop.permute.xlu0 %1570
      %1574 = vset.pattern.permute.xlu0 0
      %1575 = vperm.xlu0 %1574, %v1553
      %v1576 = vpop.permute.xlu0 %1575
      %1579 = vset.pattern.permute.xlu0 0
      %1580 = vperm.xlu0 %1579, %v1554
      %v1581 = vpop.permute.xlu0 %1580
      %1584 = vset.pattern.permute.xlu0 0
      %1585 = vperm.xlu0 %1584, %v1555
      %v1586 = vpop.permute.xlu0 %1585
      %1589 = vset.pattern.permute.xlu0 0
      %1590 = vperm.xlu0 %1589, %v1556
      %v1591 = vpop.permute.xlu0 %1590
      %1594 = vset.pattern.permute.xlu0 0
      %1595 = vperm.xlu0 %1594, %v1557
      %v1596 = vpop.permute.xlu0 %1595
      %v1606 = vunpack.c.l.b16 %v1542
      %v1607 = vunpack.c.l.b16 %v1543
      %v1608 = vunpack.c.l.b16 %v1544
      %v1609 = vunpack.c.l.b16 %v1545
      %v1610 = vunpack.c.l.b16 %v1546
      %v1611 = vunpack.c.l.b16 %v1547
      %v1612 = vunpack.c.l.b16 %v1548
      %v1613 = vunpack.c.l.b16 %v1549
      %v1614 = vpack.c.b16 %v1607, %v1606
      %v1615 = vpack.c.b16 %v1609, %v1608
      %v1616 = vpack.c.b16 %v1611, %v1610
      %v1617 = vpack.c.b16 %v1613, %v1612
      %v1619 = vsel %vm1110, %v1614, 0
      %v1622 = vsel %vm1110, %v1615, 0
      %v1625 = vsel %vm1110, %v1616, 0
      %v1628 = vsel %vm1110, %v1617, 0
      %1630 = vmatpush.bf16.msra.mxu0 0
      %1631 = vmatpush.bf16.msra.mxu0 0
      %1632 = vmatpush.bf16.msra.mxu0 0
      %1633 = vmatpush.bf16.msra.mxu0 0
      %1634 = vmatpush.bf16.msra.mxu0 %v1541
      %1635 = vmatpush.bf16.msra.mxu0 %v1540
      %1636 = vmatpush.bf16.msra.mxu0 %v1539
      %1637 = vmatpush.bf16.msra.mxu0 %v1538
      %1638 = vmatmul.bf16.gmra.mxu0 %v1619
      %v1639 = vpop.f32.mrf.mxu0
      %v1640 = vadd.f32 %v1561, %v1639
      %v1641 = vpop.f32.mrf.mxu0
      %v1642 = vadd.f32 %v1566, %v1641
      %1643 = vmatmul.bf16.gmra.mxu0 %v1622
      %v1644 = vpop.f32.mrf.mxu0
      %v1645 = vadd.f32 %v1571, %v1644
      %v1646 = vpop.f32.mrf.mxu0
      %v1647 = vadd.f32 %v1576, %v1646
      %1648 = vmatmul.bf16.gmra.mxu0 %v1625
      %v1649 = vpop.f32.mrf.mxu0
      %v1650 = vadd.f32 %v1581, %v1649
      %v1651 = vpop.f32.mrf.mxu0
      %v1652 = vadd.f32 %v1586, %v1651
      %1653 = vmatmul.bf16.gmra.mxu0 %v1628
      %v1654 = vpop.f32.mrf.mxu0
      %v1655 = vadd.f32 %v1591, %v1654
      %v1656 = vpop.f32.mrf.mxu0
      %v1657 = vadd.f32 %v1596, %v1656
      %1658 = vdwg.mxu0
      %v1659 = vmax.f32 %v1640, 0.0
      %v1660 = vmax.f32 %v1642, 0.0
      %v1661 = vmax.f32 %v1645, 0.0
      %v1662 = vmax.f32 %v1647, 0.0
      %v1663 = vmax.f32 %v1650, 0.0
      %v1664 = vmax.f32 %v1652, 0.0
      %v1665 = vmax.f32 %v1655, 0.0
      %v1666 = vmax.f32 %v1657, 0.0
      %v1667 = vpack.c.bf16 %v1660, %v1659
      %v1668 = vpack.c.bf16 %v1662, %v1661
      %v1669 = vpack.c.bf16 %v1664, %v1663
      %v1670 = vpack.c.bf16 %v1666, %v1665
      %v1671 = vld [vmem:[%s11] sm:$0xf]
      %v1672 = vld [vmem:[%s11 + $0x4] sm:$0xf]
      %v1673 = vld [vmem:[%s11 + $0x8] sm:$0xf]
      %v1674 = vld [vmem:[%s11 + $0xc] sm:$0xf]
      %v1675 = vld [vmem:[%s11 + $0x10] sm:$0xf]
      %v1676 = vld [vmem:[%s11 + $0x14] sm:$0xf]
      %v1677 = vld [vmem:[%s11 + $0x18] sm:$0xf]
      %v1678 = vld [vmem:[%s11 + $0x1c] sm:$0xf]
      %v1679 = vld [vmem:[%s12] sm:$0xf]
      %v1680 = vld [vmem:[%s12 + $0x4] sm:$0xf]
      %v1681 = vld [vmem:[%s12 + $0x8] sm:$0xf]
      %v1682 = vld [vmem:[%s12 + $0xc] sm:$0xf]
      %v1683 = vld [vmem:[%s12 + $0x10] sm:$0xf]
      %v1684 = vld [vmem:[%s12 + $0x14] sm:$0xf]
      %v1685 = vld [vmem:[%s12 + $0x18] sm:$0xf]
      %v1686 = vld [vmem:[%s12 + $0x1c] sm:$0xf]
      %v1695 = vunpack.c.l.b16 %v1679
      %v1696 = vunpack.c.l.b16 %v1680
      %v1697 = vunpack.c.l.b16 %v1681
      %v1698 = vunpack.c.l.b16 %v1682
      %v1699 = vunpack.c.l.b16 %v1683
      %v1700 = vunpack.c.l.b16 %v1684
      %v1701 = vunpack.c.l.b16 %v1685
      %v1702 = vunpack.c.l.b16 %v1686
      %v1703 = vpack.c.b16 %v1696, %v1695
      %v1704 = vpack.c.b16 %v1698, %v1697
      %v1705 = vpack.c.b16 %v1700, %v1699
      %v1706 = vpack.c.b16 %v1702, %v1701
      %v1708 = vsel %vm1110, %v1703, 0
      %v1711 = vsel %vm1110, %v1704, 0
      %v1714 = vsel %vm1110, %v1705, 0
      %v1717 = vsel %vm1110, %v1706, 0
      %1719 = vmatpush.bf16.msra.mxu0 0
      %1720 = vmatpush.bf16.msra.mxu0 0
      %1721 = vmatpush.bf16.msra.mxu0 0
      %1722 = vmatpush.bf16.msra.mxu0 0
      %1723 = vmatpush.bf16.msra.mxu0 %v1464
      %1724 = vmatpush.bf16.msra.mxu0 %v1463
      %1725 = vmatpush.bf16.msra.mxu0 %v1462
      %1726 = vmatpush.bf16.msra.mxu0 %v1461
      %1727 = vmatmul.bf16.gmra.mxu0 %v1708
      %v1728 = vpop.f32.mrf.mxu0
      %v1729 = vadd.f32 0.0, %v1728
      %v1730 = vpop.f32.mrf.mxu0
      %v1731 = vadd.f32 0.0, %v1730
      %1732 = vmatmul.bf16.gmra.mxu0 %v1711
      %v1733 = vpop.f32.mrf.mxu0
      %v1734 = vadd.f32 0.0, %v1733
      %v1735 = vpop.f32.mrf.mxu0
      %v1736 = vadd.f32 0.0, %v1735
      %1737 = vmatmul.bf16.gmra.mxu0 %v1714
      %v1738 = vpop.f32.mrf.mxu0
      %v1739 = vadd.f32 0.0, %v1738
      %v1740 = vpop.f32.mrf.mxu0
      %v1741 = vadd.f32 0.0, %v1740
      %1742 = vmatmul.bf16.gmra.mxu0 %v1717
      %v1743 = vpop.f32.mrf.mxu0
      %v1744 = vadd.f32 0.0, %v1743
      %v1745 = vpop.f32.mrf.mxu0
      %v1746 = vadd.f32 0.0, %v1745
      %1747 = vdwg.mxu0
      %v1748 = vpack.c.bf16 %v1731, %v1729
      %v1749 = vpack.c.bf16 %v1736, %v1734
      %v1750 = vpack.c.bf16 %v1741, %v1739
      %v1751 = vpack.c.bf16 %v1746, %v1744
      %v1752 = vld [vmem:[%s15] sm:$0xff]
      %v1753 = vld [vmem:[%s15 + $0x8] sm:$0xff]
      %v1754 = vld [vmem:[%s15 + $0x10] sm:$0xff]
      %v1755 = vld [vmem:[%s15 + $0x18] sm:$0xff]
      %v1756 = vld [vmem:[%s15 + $0x20] sm:$0xff]
      %v1757 = vld [vmem:[%s15 + $0x28] sm:$0xff]
      %v1758 = vld [vmem:[%s15 + $0x30] sm:$0xff]
      %v1759 = vld [vmem:[%s15 + $0x38] sm:$0xff]
      %v1768 = vunpack.c.l.b16 %v1752
      %v1769 = vunpack.c.h.b16 %v1752
      %v1770 = vunpack.c.l.b16 %v1753
      %v1771 = vunpack.c.h.b16 %v1753
      %v1772 = vunpack.c.l.b16 %v1754
      %v1773 = vunpack.c.h.b16 %v1754
      %v1774 = vunpack.c.l.b16 %v1755
      %v1775 = vunpack.c.h.b16 %v1755
      %v1776 = vunpack.c.l.b16 %v1756
      %v1777 = vunpack.c.h.b16 %v1756
      %v1778 = vunpack.c.l.b16 %v1757
      %v1779 = vunpack.c.h.b16 %v1757
      %v1780 = vunpack.c.l.b16 %v1758
      %v1781 = vunpack.c.h.b16 %v1758
      %v1782 = vunpack.c.l.b16 %v1759
      %v1783 = vunpack.c.h.b16 %v1759
      %v1784 = vpack.c.b16 %v1770, %v1768
      %v1785 = vpack.c.b16 %v1771, %v1769
      %v1786 = vpack.c.b16 %v1774, %v1772
      %v1787 = vpack.c.b16 %v1775, %v1773
      %v1788 = vpack.c.b16 %v1778, %v1776
      %v1789 = vpack.c.b16 %v1779, %v1777
      %v1790 = vpack.c.b16 %v1782, %v1780
      %v1791 = vpack.c.b16 %v1783, %v1781
      %v1801 = vsel %vm1110, %v1748, 0
      %v1804 = vsel %vm1110, %v1749, 0
      %v1807 = vsel %vm1110, %v1750, 0
      %v1810 = vsel %vm1110, %v1751, 0
      %1812 = vmatpush.bf16.msra.mxu0 0
      %1813 = vmatpush.bf16.msra.mxu0 0
      %1814 = vmatpush.bf16.msra.mxu0 0
      %1815 = vmatpush.bf16.msra.mxu0 0
      %1816 = vmatpush.bf16.msra.mxu0 %v1790
      %1817 = vmatpush.bf16.msra.mxu0 %v1788
      %1818 = vmatpush.bf16.msra.mxu0 %v1786
      %1819 = vmatpush.bf16.msra.mxu0 %v1784
      %1820 = vmatmul.bf16.gmra.mxu0 %v1801
      %v1821 = vpop.f32.mrf.mxu0
      %v1822 = vadd.f32 0.0, %v1821
      %v1823 = vpop.f32.mrf.mxu0
      %v1824 = vadd.f32 0.0, %v1823
      %1825 = vmatmul.bf16.gmra.mxu0 %v1804
      %v1826 = vpop.f32.mrf.mxu0
      %v1827 = vadd.f32 0.0, %v1826
      %v1828 = vpop.f32.mrf.mxu0
      %v1829 = vadd.f32 0.0, %v1828
      %1830 = vmatmul.bf16.gmra.mxu0 %v1807
      %v1831 = vpop.f32.mrf.mxu0
      %v1832 = vadd.f32 0.0, %v1831
      %v1833 = vpop.f32.mrf.mxu0
      %v1834 = vadd.f32 0.0, %v1833
      %1835 = vmatmul.bf16.gmra.mxu0 %v1810
      %v1836 = vpop.f32.mrf.mxu0
      %v1837 = vadd.f32 0.0, %v1836
      %v1838 = vpop.f32.mrf.mxu0
      %v1839 = vadd.f32 0.0, %v1838
      %1840 = vdwg.mxu0
      %1841 = vmatpush.bf16.msra.mxu0 0
      %1842 = vmatpush.bf16.msra.mxu0 0
      %1843 = vmatpush.bf16.msra.mxu0 0
      %1844 = vmatpush.bf16.msra.mxu0 0
      %1845 = vmatpush.bf16.msra.mxu0 %v1791
      %1846 = vmatpush.bf16.msra.mxu0 %v1789
      %1847 = vmatpush.bf16.msra.mxu0 %v1787
      %1848 = vmatpush.bf16.msra.mxu0 %v1785
      %1849 = vmatmul.bf16.gmra.mxu0 %v1801
      %v1850 = vpop.f32.mrf.mxu0
      %v1851 = vadd.f32 0.0, %v1850
      %v1852 = vpop.f32.mrf.mxu0
      %v1853 = vadd.f32 0.0, %v1852
      %1854 = vmatmul.bf16.gmra.mxu0 %v1804
      %v1855 = vpop.f32.mrf.mxu0
      %v1856 = vadd.f32 0.0, %v1855
      %v1857 = vpop.f32.mrf.mxu0
      %v1858 = vadd.f32 0.0, %v1857
      %1859 = vmatmul.bf16.gmra.mxu0 %v1807
      %v1860 = vpop.f32.mrf.mxu0
      %v1861 = vadd.f32 0.0, %v1860
      %v1862 = vpop.f32.mrf.mxu0
      %v1863 = vadd.f32 0.0, %v1862
      %1864 = vmatmul.bf16.gmra.mxu0 %v1810
      %v1865 = vpop.f32.mrf.mxu0
      %v1866 = vadd.f32 0.0, %v1865
      %v1867 = vpop.f32.mrf.mxu0
      %v1868 = vadd.f32 0.0, %v1867
      %1869 = vdwg.mxu0
      %v1878 = vunpack.c.l.b16 %v1671
      %v1879 = vunpack.c.l.b16 %v1672
      %v1880 = vunpack.c.l.b16 %v1673
      %v1881 = vunpack.c.l.b16 %v1674
      %v1882 = vunpack.c.l.b16 %v1675
      %v1883 = vunpack.c.l.b16 %v1676
      %v1884 = vunpack.c.l.b16 %v1677
      %v1885 = vunpack.c.l.b16 %v1678
      %v1886 = vpack.c.b16 %v1879, %v1878
      %v1887 = vpack.c.b16 %v1881, %v1880
      %v1888 = vpack.c.b16 %v1883, %v1882
      %v1889 = vpack.c.b16 %v1885, %v1884
      %v1891 = vsel %vm1411, %v1886, 0
      %v1894 = vsel %vm1411, %v1887, 0
      %v1897 = vsel %vm1411, %v1888, 0
      %v1900 = vsel %vm1411, %v1889, 0
      %1902 = vmatpush.bf16.msra.mxu0 0
      %1903 = vmatpush.bf16.msra.mxu0 0
      %1904 = vmatpush.bf16.msra.mxu0 0
      %1905 = vmatpush.bf16.msra.mxu0 0
      %1906 = vmatpush.bf16.msra.mxu0 0
      %1907 = vmatpush.bf16.msra.mxu0 0
      %1908 = vmatpush.bf16.msra.mxu0 %v1165
      %1909 = vmatpush.bf16.msra.mxu0 %v1163
      %1910 = vmatmul.bf16.gmra.mxu0 %v1891
      %v1911 = vpop.f32.mrf.mxu0
      %v1912 = vadd.f32 %v1822, %v1911
      %v1913 = vpop.f32.mrf.mxu0
      %v1914 = vadd.f32 %v1824, %v1913
      %1915 = vmatmul.bf16.gmra.mxu0 %v1894
      %v1916 = vpop.f32.mrf.mxu0
      %v1917 = vadd.f32 %v1827, %v1916
      %v1918 = vpop.f32.mrf.mxu0
      %v1919 = vadd.f32 %v1829, %v1918
      %1920 = vmatmul.bf16.gmra.mxu0 %v1897
      %v1921 = vpop.f32.mrf.mxu0
      %v1922 = vadd.f32 %v1832, %v1921
      %v1923 = vpop.f32.mrf.mxu0
      %v1924 = vadd.f32 %v1834, %v1923
      %1925 = vmatmul.bf16.gmra.mxu0 %v1900
      %v1926 = vpop.f32.mrf.mxu0
      %v1927 = vadd.f32 %v1837, %v1926
      %v1928 = vpop.f32.mrf.mxu0
      %v1929 = vadd.f32 %v1839, %v1928
      %1930 = vdwg.mxu0
      %1931 = vmatpush.bf16.msra.mxu0 0
      %1932 = vmatpush.bf16.msra.mxu0 0
      %1933 = vmatpush.bf16.msra.mxu0 0
      %1934 = vmatpush.bf16.msra.mxu0 0
      %1935 = vmatpush.bf16.msra.mxu0 0
      %1936 = vmatpush.bf16.msra.mxu0 0
      %1937 = vmatpush.bf16.msra.mxu0 %v1166
      %1938 = vmatpush.bf16.msra.mxu0 %v1164
      %1939 = vmatmul.bf16.gmra.mxu0 %v1891
      %v1940 = vpop.f32.mrf.mxu0
      %v1941 = vadd.f32 %v1851, %v1940
      %v1942 = vpop.f32.mrf.mxu0
      %v1943 = vadd.f32 %v1853, %v1942
      %1944 = vmatmul.bf16.gmra.mxu0 %v1894
      %v1945 = vpop.f32.mrf.mxu0
      %v1946 = vadd.f32 %v1856, %v1945
      %v1947 = vpop.f32.mrf.mxu0
      %v1948 = vadd.f32 %v1858, %v1947
      %1949 = vmatmul.bf16.gmra.mxu0 %v1897
      %v1950 = vpop.f32.mrf.mxu0
      %v1951 = vadd.f32 %v1861, %v1950
      %v1952 = vpop.f32.mrf.mxu0
      %v1953 = vadd.f32 %v1863, %v1952
      %1954 = vmatmul.bf16.gmra.mxu0 %v1900
      %v1955 = vpop.f32.mrf.mxu0
      %v1956 = vadd.f32 %v1866, %v1955
      %v1957 = vpop.f32.mrf.mxu0
      %v1958 = vadd.f32 %v1868, %v1957
      %1959 = vdwg.mxu0
      %v1960 = vld [vmem:[%s13] sm:$0xf]
      %v1961 = vld [vmem:[%s13 + $0x4] sm:$0xf]
      %v1962 = vld [vmem:[%s13 + $0x8] sm:$0xf]
      %v1963 = vld [vmem:[%s13 + $0xc] sm:$0xf]
      %v1964 = vld [vmem:[%s13 + $0x10] sm:$0xf]
      %v1965 = vld [vmem:[%s13 + $0x14] sm:$0xf]
      %v1966 = vld [vmem:[%s13 + $0x18] sm:$0xf]
      %v1967 = vld [vmem:[%s13 + $0x1c] sm:$0xf]
      %v1976 = vunpack.c.l.b16 %v1960
      %v1977 = vunpack.c.l.b16 %v1961
      %v1978 = vunpack.c.l.b16 %v1962
      %v1979 = vunpack.c.l.b16 %v1963
      %v1980 = vunpack.c.l.b16 %v1964
      %v1981 = vunpack.c.l.b16 %v1965
      %v1982 = vunpack.c.l.b16 %v1966
      %v1983 = vunpack.c.l.b16 %v1967
      %v1984 = vpack.c.b16 %v1977, %v1976
      %v1985 = vpack.c.b16 %v1979, %v1978
      %v1986 = vpack.c.b16 %v1981, %v1980
      %v1987 = vpack.c.b16 %v1983, %v1982
      %v1989 = vsel %vm1110, %v1984, 0
      %v1992 = vsel %vm1110, %v1985, 0
      %v1995 = vsel %vm1110, %v1986, 0
      %v1998 = vsel %vm1110, %v1987, 0
      %2000 = vmatpush.bf16.msra.mxu0 0
      %2001 = vmatpush.bf16.msra.mxu0 0
      %2002 = vmatpush.bf16.msra.mxu0 0
      %2003 = vmatpush.bf16.msra.mxu0 0
      %2004 = vmatpush.bf16.msra.mxu0 %v1670
      %2005 = vmatpush.bf16.msra.mxu0 %v1669
      %2006 = vmatpush.bf16.msra.mxu0 %v1668
      %2007 = vmatpush.bf16.msra.mxu0 %v1667
      %2008 = vmatmul.bf16.gmra.mxu0 %v1989
      %v2009 = vpop.f32.mrf.mxu0
      %v2010 = vadd.f32 0.0, %v2009
      %v2011 = vpop.f32.mrf.mxu0
      %v2012 = vadd.f32 0.0, %v2011
      %2013 = vmatmul.bf16.gmra.mxu0 %v1992
      %v2014 = vpop.f32.mrf.mxu0
      %v2015 = vadd.f32 0.0, %v2014
      %v2016 = vpop.f32.mrf.mxu0
      %v2017 = vadd.f32 0.0, %v2016
      %2018 = vmatmul.bf16.gmra.mxu0 %v1995
      %v2019 = vpop.f32.mrf.mxu0
      %v2020 = vadd.f32 0.0, %v2019
      %v2021 = vpop.f32.mrf.mxu0
      %v2022 = vadd.f32 0.0, %v2021
      %2023 = vmatmul.bf16.gmra.mxu0 %v1998
      %v2024 = vpop.f32.mrf.mxu0
      %v2025 = vadd.f32 0.0, %v2024
      %v2026 = vpop.f32.mrf.mxu0
      %v2027 = vadd.f32 0.0, %v2026
      %2028 = vdwg.mxu0
      %v2029 = vpack.c.bf16 %v2012, %v2010
      %v2030 = vpack.c.bf16 %v2017, %v2015
      %v2031 = vpack.c.bf16 %v2022, %v2020
      %v2032 = vpack.c.bf16 %v2027, %v2025
      %v2033 = vld [vmem:[%s16] sm:$0xff]
      %v2034 = vld [vmem:[%s16 + $0x8] sm:$0xff]
      %v2037 = vunpack.c.l.b16 %v2033
      %v2038 = vunpack.c.h.b16 %v2033
      %v2039 = vunpack.c.l.b16 %v2034
      %v2040 = vunpack.c.h.b16 %v2034
      %v2041 = vpack.c.b16 %v2039, %v2037
      %v2042 = vpack.c.b16 %v2040, %v2038
      %vm2045 = vcmask 130048
      %v2047 = vsel %vm2045, %v2029, 0
      %v2050 = vsel %vm2045, %v2030, 0
      %v2053 = vsel %vm2045, %v2031, 0
      %v2056 = vsel %vm2045, %v2032, 0
      %2058 = vmatpush.bf16.msra.mxu0 0
      %2059 = vmatpush.bf16.msra.mxu0 0
      %2060 = vmatpush.bf16.msra.mxu0 0
      %2061 = vmatpush.bf16.msra.mxu0 0
      %2062 = vmatpush.bf16.msra.mxu0 0
      %2063 = vmatpush.bf16.msra.mxu0 0
      %2064 = vmatpush.bf16.msra.mxu0 0
      %2065 = vmatpush.bf16.msra.mxu0 %v2041
      %2066 = vmatmul.bf16.gmra.mxu0 %v2047
      %v2067 = vpop.f32.mrf.mxu0
      %v2068 = vadd.f32 0.0, %v2067
      %v2069 = vpop.f32.mrf.mxu0
      %v2070 = vadd.f32 0.0, %v2069
      %2071 = vmatmul.bf16.gmra.mxu0 %v2050
      %v2072 = vpop.f32.mrf.mxu0
      %v2073 = vadd.f32 0.0, %v2072
      %v2074 = vpop.f32.mrf.mxu0
      %v2075 = vadd.f32 0.0, %v2074
      %2076 = vmatmul.bf16.gmra.mxu0 %v2053
      %v2077 = vpop.f32.mrf.mxu0
      %v2078 = vadd.f32 0.0, %v2077
      %v2079 = vpop.f32.mrf.mxu0
      %v2080 = vadd.f32 0.0, %v2079
      %2081 = vmatmul.bf16.gmra.mxu0 %v2056
      %v2082 = vpop.f32.mrf.mxu0
      %v2083 = vadd.f32 0.0, %v2082
      %v2084 = vpop.f32.mrf.mxu0
      %v2085 = vadd.f32 0.0, %v2084
      %2086 = vdwg.mxu0
      %2087 = vmatpush.bf16.msra.mxu0 0
      %2088 = vmatpush.bf16.msra.mxu0 0
      %2089 = vmatpush.bf16.msra.mxu0 0
      %2090 = vmatpush.bf16.msra.mxu0 0
      %2091 = vmatpush.bf16.msra.mxu0 0
      %2092 = vmatpush.bf16.msra.mxu0 0
      %2093 = vmatpush.bf16.msra.mxu0 0
      %2094 = vmatpush.bf16.msra.mxu0 %v2042
      %2095 = vmatmul.bf16.gmra.mxu0 %v2047
      %v2096 = vpop.f32.mrf.mxu0
      %v2097 = vadd.f32 0.0, %v2096
      %v2098 = vpop.f32.mrf.mxu0
      %v2099 = vadd.f32 0.0, %v2098
      %2100 = vmatmul.bf16.gmra.mxu0 %v2050
      %v2101 = vpop.f32.mrf.mxu0
      %v2102 = vadd.f32 0.0, %v2101
      %v2103 = vpop.f32.mrf.mxu0
      %v2104 = vadd.f32 0.0, %v2103
      %2105 = vmatmul.bf16.gmra.mxu0 %v2053
      %v2106 = vpop.f32.mrf.mxu0
      %v2107 = vadd.f32 0.0, %v2106
      %v2108 = vpop.f32.mrf.mxu0
      %v2109 = vadd.f32 0.0, %v2108
      %2110 = vmatmul.bf16.gmra.mxu0 %v2056
      %v2111 = vpop.f32.mrf.mxu0
      %v2112 = vadd.f32 0.0, %v2111
      %v2113 = vpop.f32.mrf.mxu0
      %v2114 = vadd.f32 0.0, %v2113
      %2115 = vdwg.mxu0
      %v2116 = vadd.f32 %v1912, %v2068
      %v2117 = vadd.f32 %v1941, %v2097
      %v2118 = vadd.f32 %v1914, %v2070
      %v2119 = vadd.f32 %v1943, %v2099
      %v2120 = vadd.f32 %v1917, %v2073
      %v2121 = vadd.f32 %v1946, %v2102
      %v2122 = vadd.f32 %v1919, %v2075
      %v2123 = vadd.f32 %v1948, %v2104
      %v2124 = vadd.f32 %v1922, %v2078
      %v2125 = vadd.f32 %v1951, %v2107
      %v2126 = vadd.f32 %v1924, %v2080
      %v2127 = vadd.f32 %v1953, %v2109
      %v2128 = vadd.f32 %v1927, %v2083
      %v2129 = vadd.f32 %v1956, %v2112
      %v2130 = vadd.f32 %v1929, %v2085
      %v2131 = vadd.f32 %v1958, %v2114
      %v2132 = vld [vmem:[%s14] sm:$0xff]
      %v2133 = vld [vmem:[%s14 + $0x8] sm:$0xff]
      %v2134 = vld [vmem:[%s14 + $0x10] sm:$0xff]
      %v2135 = vld [vmem:[%s14 + $0x18] sm:$0xff]
      %v2136 = vld [vmem:[%s14 + $0x20] sm:$0xff]
      %v2137 = vld [vmem:[%s14 + $0x28] sm:$0xff]
      %v2138 = vld [vmem:[%s14 + $0x30] sm:$0xff]
      %v2139 = vld [vmem:[%s14 + $0x38] sm:$0xff]
      %2141 = vset.pattern.permute.xlu0 0
      %2142 = vperm.xlu0 %2141, %v2132
      %v2143 = vpop.permute.xlu0 %2142
      %2146 = vset.pattern.permute.xlu0 0
      %2147 = vperm.xlu0 %2146, %v2133
      %v2148 = vpop.permute.xlu0 %2147
      %2151 = vset.pattern.permute.xlu0 0
      %2152 = vperm.xlu0 %2151, %v2134
      %v2153 = vpop.permute.xlu0 %2152
      %2156 = vset.pattern.permute.xlu0 0
      %2157 = vperm.xlu0 %2156, %v2135
      %v2158 = vpop.permute.xlu0 %2157
      %2161 = vset.pattern.permute.xlu0 0
      %2162 = vperm.xlu0 %2161, %v2136
      %v2163 = vpop.permute.xlu0 %2162
      %2166 = vset.pattern.permute.xlu0 0
      %2167 = vperm.xlu0 %2166, %v2137
      %v2168 = vpop.permute.xlu0 %2167
      %2171 = vset.pattern.permute.xlu0 0
      %2172 = vperm.xlu0 %2171, %v2138
      %v2173 = vpop.permute.xlu0 %2172
      %2176 = vset.pattern.permute.xlu0 0
      %2177 = vperm.xlu0 %2176, %v2139
      %v2178 = vpop.permute.xlu0 %2177
      %v2180 = vadd.f32 %v2116, %v2143
      %v2181 = vadd.f32 %v2117, %v2143
      %v2182 = vadd.f32 %v2118, %v2148
      %v2183 = vadd.f32 %v2119, %v2148
      %v2184 = vadd.f32 %v2120, %v2153
      %v2185 = vadd.f32 %v2121, %v2153
      %v2186 = vadd.f32 %v2122, %v2158
      %v2187 = vadd.f32 %v2123, %v2158
      %v2188 = vadd.f32 %v2124, %v2163
      %v2189 = vadd.f32 %v2125, %v2163
      %v2190 = vadd.f32 %v2126, %v2168
      %v2191 = vadd.f32 %v2127, %v2168
      %v2192 = vadd.f32 %v2128, %v2173
      %v2193 = vadd.f32 %v2129, %v2173
      %v2194 = vadd.f32 %v2130, %v2178
      %v2195 = vadd.f32 %v2131, %v2178
      %vm2196 = vcmp.ge.f32.partialorder %v2180, 0.0
      %vm2197 = vcmp.ge.f32.partialorder %v2181, 0.0
      %vm2198 = vcmp.ge.f32.partialorder %v2182, 0.0
      %vm2199 = vcmp.ge.f32.partialorder %v2183, 0.0
      %vm2200 = vcmp.ge.f32.partialorder %v2184, 0.0
      %vm2201 = vcmp.ge.f32.partialorder %v2185, 0.0
      %vm2202 = vcmp.ge.f32.partialorder %v2186, 0.0
      %vm2203 = vcmp.ge.f32.partialorder %v2187, 0.0
      %vm2204 = vcmp.ge.f32.partialorder %v2188, 0.0
      %vm2205 = vcmp.ge.f32.partialorder %v2189, 0.0
      %vm2206 = vcmp.ge.f32.partialorder %v2190, 0.0
      %vm2207 = vcmp.ge.f32.partialorder %v2191, 0.0
      %vm2208 = vcmp.ge.f32.partialorder %v2192, 0.0
      %vm2209 = vcmp.ge.f32.partialorder %v2193, 0.0
      %vm2210 = vcmp.ge.f32.partialorder %v2194, 0.0
      %vm2211 = vcmp.ge.f32.partialorder %v2195, 0.0
      %v2212 = vmul.f32 %v2180, 0.25
      %v2213 = vmul.f32 %v2181, 0.25
      %v2214 = vmul.f32 %v2182, 0.25
      %v2215 = vmul.f32 %v2183, 0.25
      %v2216 = vmul.f32 %v2184, 0.25
      %v2217 = vmul.f32 %v2185, 0.25
      %v2218 = vmul.f32 %v2186, 0.25
      %v2219 = vmul.f32 %v2187, 0.25
      %v2220 = vmul.f32 %v2188, 0.25
      %v2221 = vmul.f32 %v2189, 0.25
      %v2222 = vmul.f32 %v2190, 0.25
      %v2223 = vmul.f32 %v2191, 0.25
      %v2224 = vmul.f32 %v2192, 0.25
      %v2225 = vmul.f32 %v2193, 0.25
      %v2226 = vmul.f32 %v2194, 0.25
      %v2227 = vmul.f32 %v2195, 0.25
      %v2228 = vsel %vm2196, %v2180, %v2212
      %v2229 = vsel %vm2197, %v2181, %v2213
      %v2230 = vsel %vm2198, %v2182, %v2214
      %v2231 = vsel %vm2199, %v2183, %v2215
      %v2232 = vsel %vm2200, %v2184, %v2216
      %v2233 = vsel %vm2201, %v2185, %v2217
      %v2234 = vsel %vm2202, %v2186, %v2218
      %v2235 = vsel %vm2203, %v2187, %v2219
      %v2236 = vsel %vm2204, %v2188, %v2220
      %v2237 = vsel %vm2205, %v2189, %v2221
      %v2238 = vsel %vm2206, %v2190, %v2222
      %v2239 = vsel %vm2207, %v2191, %v2223
      %v2240 = vsel %vm2208, %v2192, %v2224
      %v2241 = vsel %vm2209, %v2193, %v2225
      %v2242 = vsel %vm2210, %v2194, %v2226
      %v2243 = vsel %vm2211, %v2195, %v2227
      %v2244 = vld [vmem:[%s17] sm:$0xf]
      %v2245 = vld [vmem:[%s17 + $0x4] sm:$0xf]
      %v2246 = vpack.c.bf16 %v2230, %v2228
      %v2247 = vpack.c.bf16 %v2231, %v2229
      %v2248 = vpack.c.bf16 %v2234, %v2232
      %v2249 = vpack.c.bf16 %v2235, %v2233
      %v2250 = vpack.c.bf16 %v2238, %v2236
      %v2251 = vpack.c.bf16 %v2239, %v2237
      %v2252 = vpack.c.bf16 %v2242, %v2240
      %v2253 = vpack.c.bf16 %v2243, %v2241
      %v2254 = vld [vmem:[%s18] sm:$0xff]
      %v2255 = vld [vmem:[%s18 + $0x8] sm:$0xff]
      %2257 = vset.pattern.permute.xlu0 0
      %2258 = vperm.xlu0 %2257, %v2254
      %v2259 = vpop.permute.xlu0 %2258
      %2262 = vset.pattern.permute.xlu0 0
      %2263 = vperm.xlu0 %2262, %v2255
      %v2264 = vpop.permute.xlu0 %2263
      %v2268 = vunpack.c.l.b16 %v2244
      %v2269 = vunpack.c.l.b16 %v2245
      %v2270 = vpack.c.b16 %v2269, %v2268
      %v2272 = vsel %vm1110, %v2270, 0
      %2274 = vmatpush.bf16.msra.mxu0 0
      %2275 = vmatpush.bf16.msra.mxu0 0
      %2276 = vmatpush.bf16.msra.mxu0 0
      %2277 = vmatpush.bf16.msra.mxu0 0
      %2278 = vmatpush.bf16.msra.mxu0 %v2252
      %2279 = vmatpush.bf16.msra.mxu0 %v2250
      %2280 = vmatpush.bf16.msra.mxu0 %v2248
      %2281 = vmatpush.bf16.msra.mxu0 %v2246
      %2282 = vmatmul.bf16.gmra.mxu0 %v2272
      %v2283 = vpop.f32.mrf.mxu0
      %v2284 = vadd.f32 %v2259, %v2283
      %v2285 = vpop.f32.mrf.mxu0
      %v2286 = vadd.f32 %v2264, %v2285
      %2287 = vdwg.mxu0
      %2288 = vmatpush.bf16.msra.mxu0 0
      %2289 = vmatpush.bf16.msra.mxu0 0
      %2290 = vmatpush.bf16.msra.mxu0 0
      %2291 = vmatpush.bf16.msra.mxu0 0
      %2292 = vmatpush.bf16.msra.mxu0 %v2253
      %2293 = vmatpush.bf16.msra.mxu0 %v2251
      %2294 = vmatpush.bf16.msra.mxu0 %v2249
      %2295 = vmatpush.bf16.msra.mxu0 %v2247
      %2296 = vmatmul.bf16.gmra.mxu0 %v2272
      %v2297 = vpop.f32.mrf.mxu0
      %v2298 = vadd.f32 %v2259, %v2297
      %v2299 = vpop.f32.mrf.mxu0
      %v2300 = vadd.f32 %v2264, %v2299
      %2301 = vdwg.mxu0
      %v2302 = vsub.f32 0.0, %v2284
      %v2303 = vsub.f32 0.0, %v2298
      %v2304 = vmul.f32 %v2302, 1.442695
      %v2305 = vpow.pop %v2304
      %v2306 = vmul.f32 %v2303, 1.442695
      %v2307 = vpow.pop %v2306
      %v2308 = vadd.f32 %v2305, 1.0
      %v2309 = vadd.f32 %v2307, 1.0
      %v2310 = vrcp.pop %v2308
      %v2311 = vmul.f32 %v2308, %v2310
      %v2312 = vsub.f32 1.0, %v2311
      %v2313 = vmul.f32 %v2310, %v2312
      %v2314 = vadd.f32 %v2310, %v2313
      %vm2315 = vweird.f32 %v2308
      %vm2316 = vweird.f32 %v2310
      %vm2317 = vmor %vm2315, %vm2316
      %v2318 = vsel %vm2317, %v2310, %v2314
      %v2319 = vand.u32 2147483647, %v2308
      %vm2320 = vcmp.eq.f32.partialorder %v2319, 8.507059e+37
      %v2321 = vand.u32 %v2308, 2147483648
      %v2322 = vor.u32 1.1754944e-38, %v2321
      %v2323 = vsel %vm2320, %v2322, %v2318
      %v2324 = vmul.f32 1.0, %v2323
      %v2325 = vrcp.pop %v2309
      %v2326 = vmul.f32 %v2309, %v2325
      %v2327 = vsub.f32 1.0, %v2326
      %v2328 = vmul.f32 %v2325, %v2327
      %v2329 = vadd.f32 %v2325, %v2328
      %vm2330 = vweird.f32 %v2309
      %vm2331 = vweird.f32 %v2325
      %vm2332 = vmor %vm2330, %vm2331
      %v2333 = vsel %vm2332, %v2325, %v2329
      %v2334 = vand.u32 2147483647, %v2309
      %vm2335 = vcmp.eq.f32.partialorder %v2334, 8.507059e+37
      %v2336 = vand.u32 %v2309, 2147483648
      %v2337 = vor.u32 1.1754944e-38, %v2336
      %v2338 = vsel %vm2335, %v2337, %v2333
      %v2339 = vmul.f32 1.0, %v2338
      %2340 = vst [vmem:[%s637] sm:$0xff] %v2324
      %2341 = vst [vmem:[%s637 + $0x8] sm:$0xff] %v2339
      %v2342 = vsub.f32 0.0, %v2286
      %v2343 = vsub.f32 0.0, %v2300
      %v2344 = vmul.f32 %v2342, 1.442695
      %v2345 = vpow.pop %v2344
      %v2346 = vmul.f32 %v2343, 1.442695
      %v2347 = vpow.pop %v2346
      %v2348 = vadd.f32 %v2345, 1.0
      %v2349 = vadd.f32 %v2347, 1.0
      %v2350 = vrcp.pop %v2348
      %v2351 = vmul.f32 %v2348, %v2350
      %v2352 = vsub.f32 1.0, %v2351
      %v2353 = vmul.f32 %v2350, %v2352
      %v2354 = vadd.f32 %v2350, %v2353
      %vm2355 = vweird.f32 %v2348
      %vm2356 = vweird.f32 %v2350
      %vm2357 = vmor %vm2355, %vm2356
      %v2358 = vsel %vm2357, %v2350, %v2354
      %v2359 = vand.u32 2147483647, %v2348
      %vm2360 = vcmp.eq.f32.partialorder %v2359, 8.507059e+37
      %v2361 = vand.u32 %v2348, 2147483648
      %v2362 = vor.u32 1.1754944e-38, %v2361
      %v2363 = vsel %vm2360, %v2362, %v2358
      %v2364 = vmul.f32 1.0, %v2363
      %v2365 = vrcp.pop %v2349
      %v2366 = vmul.f32 %v2349, %v2365
      %v2367 = vsub.f32 1.0, %v2366
      %v2368 = vmul.f32 %v2365, %v2367
      %v2369 = vadd.f32 %v2365, %v2368
      %vm2370 = vweird.f32 %v2349
      %vm2371 = vweird.f32 %v2365
      %vm2372 = vmor %vm2370, %vm2371
      %v2373 = vsel %vm2372, %v2365, %v2369
      %v2374 = vand.u32 2147483647, %v2349
      %vm2375 = vcmp.eq.f32.partialorder %v2374, 8.507059e+37
      %v2376 = vand.u32 %v2349, 2147483648
      %v2377 = vor.u32 1.1754944e-38, %v2376
      %v2378 = vsel %vm2375, %v2377, %v2373
      %v2379 = vmul.f32 1.0, %v2378
      %2380 = vst [vmem:[%s642] sm:$0xff] %v2364
      %2381 = vst [vmem:[%s642 + $0x8] sm:$0xff] %v2379
      %p2382 = scmp.lt.s32.totalorder %s32, 1
      %s2383 = scalar_select %p2382, %s32, 1
      %s2384 = smul.addr %s2383, 2
      %s2385 = smul.addr %s2384, 8
      %s2386 = scalar_lea.vmem %s19, %s2385
      %p2387 = scmp.lt.s32.totalorder %s32, 1
      %s2388 = scalar_select %p2387, %s32, 1
      %s2389 = smul.addr %s2388, 2
      %s2390 = smul.addr %s2389, 8
      %s2391 = scalar_lea.vmem %s20, %s2390
      // Predicated region
      $region97: #{hupr_forward.1} parent=95 // pred_check
        %p2392 = pneg %p454
      $region98: #{hupr_forward.1} parent=95 // pred_check_branch
        %2394 = sbr.rel (%p2392) target = $region100
      $region99: #{hupr_forward.1} parent=95 // pred_region
        _
      $region100: #{hupr_forward.1} parent=95 // pred_fallthru
        _
      // Predicated region
      $region101: #{hupr_forward.1} parent=95 // pred_check
        %p2395 = pneg %p480
      $region102: #{hupr_forward.1} parent=95 // pred_check_branch
        %2397 = sbr.rel (%p2395) target = $region104
      $region103: #{hupr_forward.1} parent=95 // pred_region
        _
      $region104: #{hupr_forward.1} parent=95 // pred_fallthru
        _
    $region96: #{hupr_forward.1} parent=5 // pred_fallthru
      _
    %p2398 = scmp.le.s32.totalorder 2, %s27
    // Predicated region
    $region105: #{hupr_forward.1} parent=5 // pred_check
      %p2399 = pneg %p2398
    $region106: #{hupr_forward.1} parent=5 // pred_check_branch
      %2401 = sbr.rel (%p2399) target = $region108
    $region107: #{hupr_forward.1} parent=5 // pred_region
      %s2402 = ssub.s32 %s27, 2
      // Predicated region
      $region109: #{hupr_forward.1} parent=107 // pred_check
        %p2403 = pneg %p460
      $region110: #{hupr_forward.1} parent=107 // pred_check_branch
        %2405 = sbr.rel (%p2403) target = $region112
      $region111: #{hupr_forward.1} parent=107 // pred_region
        %p2406 = scmp.lt.s32.totalorder %s33, 1
        %s2407 = scalar_select %p2406, %s33, 1
        %s2408 = smul.addr %s2407, 2
        %s2409 = smul.addr %s2408, 8
        %s2410 = scalar_lea.vmem %s19, %s2409
      $region112: #{hupr_forward.1} parent=107 // pred_fallthru
        _
      // Predicated region
      $region113: #{hupr_forward.1} parent=107 // pred_check
        %p2411 = pneg %p486
      $region114: #{hupr_forward.1} parent=107 // pred_check_branch
        %2413 = sbr.rel (%p2411) target = $region116
      $region115: #{hupr_forward.1} parent=107 // pred_region
        %p2414 = scmp.lt.s32.totalorder %s33, 1
        %s2415 = scalar_select %p2414, %s33, 1
        %s2416 = smul.addr %s2415, 2
        %s2417 = smul.addr %s2416, 8
        %s2418 = scalar_lea.vmem %s20, %s2417
      $region116: #{hupr_forward.1} parent=107 // pred_fallthru
        _
    $region108: #{hupr_forward.1} parent=5 // pred_fallthru
      _
  $region6: #{hupr_forward.1} parent=0 // loop_footer
    %s31 = sadd.s32 1, %s27
  $region7: #{hupr_forward.1} parent=0 // loop_footer_branch
    %26 = sbr.rel target = $region3
  $region8: #{hupr_forward.1} parent=0 // loop_exit
    _

</llo_original>
